<compile_context>
chip_gen: v6e
topology: v6e:2x2x1
jax: 0.10.0
libtpu: 0.0.40
codegen_flags: <defaults>
</compile_context>

<pallas_src>
import math
import jax
import jax.numpy as jnp
from jax.experimental import pallas as pl
from jax.experimental.pallas import tpu as pltpu

LEAKY_SLOPE = 0.01        # PyTorch nn.LeakyReLU default negative_slope
NEG_PAD = -1e30           # finite large-negative for padded action logits


def _round_up(x, m):
    return ((x + m - 1) // m) * m


def _leaky_relu(x):
    return jnp.where(x > 0, x, LEAKY_SLOPE * x)


def actor_mlp_kernel(x_ref,
                     w1_ref, b1_ref,
                     w2_ref, b2_ref,
                     w3_ref, b3_ref,
                     w4_ref, b4_ref,
                     out_ref):
    # x: [tile_b, input_dim] bf16; weights: bf16; biases: f32; out: bf16.
    x = x_ref[...]

    h = jnp.dot(x, w1_ref[...], preferred_element_type=jnp.float32) + b1_ref[...]
    h = _leaky_relu(h)

    h = jnp.dot(h.astype(jnp.bfloat16), w2_ref[...],
                preferred_element_type=jnp.float32) + b2_ref[...]
    h = _leaky_relu(h)

    h = jnp.dot(h.astype(jnp.bfloat16), w3_ref[...],
                preferred_element_type=jnp.float32) + b3_ref[...]
    h = _leaky_relu(h)

    logits = jnp.dot(h.astype(jnp.bfloat16), w4_ref[...],
                     preferred_element_type=jnp.float32) + b4_ref[...]

    # Numerically-stable softmax over the padded (128-lane) action axis.
    # Padded lanes have logit = NEG_PAD, so exp underflows to exactly 0.
    m = jnp.max(logits, axis=-1, keepdims=True)
    e = jnp.exp(logits - m)
    denom = jnp.sum(e, axis=-1, keepdims=True)
    out_ref[...] = (e / denom).astype(out_ref.dtype)


def prepare_params(params):
    """Convert f32 PyTorch-layout params into kernel-ready form:
    weights -> bf16, last layer padded out to a multiple of 128 lanes."""
    (w1, b1), (w2, b2), (w3, b3), (w4, b4) = params
    n_actions = w4.shape[1]
    n_pad = max(128, _round_up(n_actions, 128))

    w4p = jnp.zeros((w4.shape[0], n_pad), jnp.float32).at[:, :n_actions].set(w4)
    b4p = jnp.full((1, n_pad), NEG_PAD, jnp.float32).at[:, :n_actions].set(b4)

    # NOTE: keeping w4 (and w1) in f32 would restore most of the logit
    # precision at negligible DMA cost, at the price of an f32 MXU pass on the
    # last layer; bf16 everywhere keeps the whole MXU path uniform.
    prepared = (
        w1.astype(jnp.bfloat16), b1.astype(jnp.float32),
        w2.astype(jnp.bfloat16), b2.astype(jnp.float32),
        w3.astype(jnp.bfloat16), b3.astype(jnp.float32),
        w4p.astype(jnp.bfloat16), b4p.astype(jnp.float32),
    )
    return prepared, n_actions


def _pick_tile_b(B):
    # Largest tile in {1024, 512, 256} that still leaves >= 2 grid blocks
    # (so both v7x TensorCores get work and per-step MXU time amortizes the
    # ~0.35 us fixed step overhead).  Small / single-block batches just round
    # up to the 8-sublane granule.
    for cand in (1024, 512, 256):
        if B >= 2 * cand:
            return cand
    if B >= 256:
        return 256
    return _round_up(B, 8)


def actor_forward(state, prepared, n_actions):
    """state: [B, input_dim] f32 -> action probabilities [B, n_actions] f32."""
    w1, b1, w2, b2, w3, b3, w4p, b4p = prepared
    B, din = state.shape
    n_pad = w4p.shape[1]

    tile_b = _pick_tile_b(B)
    Bp = _round_up(B, tile_b)

    # Halve input DMA bytes and drop the in-kernel f32->bf16 pack.
    x = state.astype(jnp.bfloat16)
    if Bp != B:
        x = jnp.pad(x, ((0, Bp - B), (0, 0)))

    def run(single_buffer):
        def resident(arr):
            # Same block index every grid step -> stays in VMEM; single-buffer
            # it (when supported) since it is never re-fetched.
            idx_map = lambda i, nd=arr.ndim: (0,) * nd
            if single_buffer:
                return pl.BlockSpec(arr.shape, idx_map,
                                    pipeline_mode=pl.Buffered(1))
            return pl.BlockSpec(arr.shape, idx_map)

        return pl.pallas_call(
            actor_mlp_kernel,
            out_shape=jax.ShapeDtypeStruct((Bp, n_pad), jnp.bfloat16),
            grid=(Bp // tile_b,),
            in_specs=[
                pl.BlockSpec((tile_b, din), lambda i: (i, 0)),
                resident(w1), resident(b1),
                resident(w2), resident(b2),
                resident(w3), resident(b3),
                resident(w4p), resident(b4p),
            ],
            out_specs=pl.BlockSpec((tile_b, n_pad), lambda i: (i, 0)),
            compiler_params=pltpu.CompilerParams(
                dimension_semantics=("parallel",),
                vmem_limit_bytes=16 << 20,
            ),
        )(x, w1, b1, w2, b2, w3, b3, w4p, b4p)

    try:
        out = run(single_buffer=True)
    except Exception:
        # pl.Buffered(1) not accepted by this jax version; default buffering.
        out = run(single_buffer=False)

    return out[:B, :n_actions].astype(jnp.float32)


def init_linear(key, fan_in, fan_out):
    """Deterministic init mimicking PyTorch nn.Linear default (uniform +/- 1/sqrt(fan_in))."""
    kw, kb = jax.random.split(key)
    bound = 1.0 / math.sqrt(fan_in)
    w = jax.random.uniform(kw, (fan_in, fan_out), jnp.float32, -bound, bound)
    b = jax.random.uniform(kb, (1, fan_out), jnp.float32, -bound, bound)
    return w, b


def make_params(key, input_dim, fc1, fc2, fc3, n_actions):
    k1, k2, k3, k4 = jax.random.split(key, 4)
    return (
        init_linear(k1, input_dim, fc1),
        init_linear(k2, fc1, fc2),
        init_linear(k3, fc2, fc3),
        init_linear(k4, fc3, n_actions),
    )


if __name__ == "__main__":
    # Small, module-consistent shapes: batch of 8 states with 16 features,
    # default hidden sizes 256, 6 discrete actions.
    B = 8
    INPUT_DIM = 16
    FC1 = FC2 = FC3 = 256
    N_ACTIONS = 6

    key = jax.random.PRNGKey(0)
    k_state, k_params = jax.random.split(key)

    state = jax.random.normal(k_state, (B, INPUT_DIM), jnp.float32)
    params = make_params(k_params, INPUT_DIM, FC1, FC2, FC3, N_ACTIONS)
    prepared, n_actions = prepare_params(params)

    probs = actor_forward(state, prepared, n_actions)
    probs = jax.block_until_ready(probs)

    # Reference 1: same mixed-precision path (bf16 weights/activations, f32 accum).
    def ref_mixed(x, params):
        def layer(h, w, b):
            return jnp.dot(h.astype(jnp.bfloat16), w.astype(jnp.bfloat16),
                           preferred_element_type=jnp.float32) + b
        (w1, b1), (w2, b2), (w3, b3), (w4, b4) = params
        h = _leaky_relu(layer(x, w1, b1))
        h = _leaky_relu(layer(h, w2, b2))
        h = _leaky_relu(layer(h, w3, b3))
        return jax.nn.softmax(layer(h, w4, b4), axis=-1)

    # Reference 2: full f32 path (semantic sanity vs the original module).
    def ref_f32(x, params):
        (w1, b1), (w2, b2), (w3, b3), (w4, b4) = params
        h = _leaky_relu(x @ w1 + b1)
        h = _leaky_relu(h @ w2 + b2)
        h = _leaky_relu(h @ w3 + b3)
        return jax.nn.softmax(h @ w4 + b4, axis=-1)

    expected_mixed = ref_mixed(state, params)
    expected_f32 = ref_f32(state, params)

    assert probs.shape == (B, N_ACTIONS)
    # Check against the matching mixed-precision path (bf16 output quantization).
    assert jnp.allclose(probs, expected_mixed, atol=1e-2, rtol=1e-2)
    # Loose semantic check against the pure-f32 PyTorch-equivalent forward.
    assert jnp.allclose(probs, expected_f32, atol=5e-2, rtol=5e-2)
    # Probabilities form a valid Categorical distribution (bf16 output tolerance).
    assert jnp.allclose(jnp.sum(probs, axis=-1), 1.0, atol=1e-2)

    print("KERNEL_OK")
</pallas_src>

<mosaic_0001>
module attributes {stable_mosaic.version = 11 : i64} {
  func.func @actor_mlp_kernel(%arg0: i32, %arg1: memref<8x16xbf16, #tpu.memory_space<vmem>>, %arg2: memref<16x256xbf16, #tpu.memory_space<vmem>>, %arg3: memref<1x256xf32, #tpu.memory_space<vmem>>, %arg4: memref<256x256xbf16, #tpu.memory_space<vmem>>, %arg5: memref<1x256xf32, #tpu.memory_space<vmem>>, %arg6: memref<256x256xbf16, #tpu.memory_space<vmem>>, %arg7: memref<1x256xf32, #tpu.memory_space<vmem>>, %arg8: memref<256x128xbf16, #tpu.memory_space<vmem>>, %arg9: memref<1x128xf32, #tpu.memory_space<vmem>>, %arg10: memref<8x128xbf16, #tpu.memory_space<vmem>>) attributes {dimension_semantics = [#tpu.dimension_semantics<parallel>], iteration_bounds = array<i64: 1>, scalar_prefetch = 0 : i64, scratch_operands = 0 : i64, tpu.core_type = #tpu.core_type<tc>, window_params = [{transform_indices = @transform_0, window_bounds = array<i64: 8, 16>}, {pipeline_mode = #tpu.pipeline_mode<synchronous>, transform_indices = @transform_1, window_bounds = array<i64: 16, 256>}, {pipeline_mode = #tpu.pipeline_mode<synchronous>, transform_indices = @transform_2, window_bounds = array<i64: 1, 256>}, {pipeline_mode = #tpu.pipeline_mode<synchronous>, transform_indices = @transform_3, window_bounds = array<i64: 256, 256>}, {pipeline_mode = #tpu.pipeline_mode<synchronous>, transform_indices = @transform_4, window_bounds = array<i64: 1, 256>}, {pipeline_mode = #tpu.pipeline_mode<synchronous>, transform_indices = @transform_5, window_bounds = array<i64: 256, 256>}, {pipeline_mode = #tpu.pipeline_mode<synchronous>, transform_indices = @transform_6, window_bounds = array<i64: 1, 256>}, {pipeline_mode = #tpu.pipeline_mode<synchronous>, transform_indices = @transform_7, window_bounds = array<i64: 256, 128>}, {pipeline_mode = #tpu.pipeline_mode<synchronous>, transform_indices = @transform_8, window_bounds = array<i64: 1, 128>}, {transform_indices = @transform_9, window_bounds = array<i64: 8, 128>}]} {
    %c0 = arith.constant 0 : index
    %c0_0 = arith.constant 0 : index
    %0 = vector.load %arg1[%c0, %c0_0] : memref<8x16xbf16, #tpu.memory_space<vmem>>, vector<8x16xbf16>
    %c0_1 = arith.constant 0 : index
    %c0_2 = arith.constant 0 : index
    %1 = vector.load %arg2[%c0_1, %c0_2] : memref<16x256xbf16, #tpu.memory_space<vmem>>, vector<16x256xbf16>
    %cst = arith.constant dense<0.000000e+00> : vector<8x256xf32>
    %2 = tpu.matmul %0, %1, %cst {dimension_numbers = #tpu.dot_dimension_numbers<[1], [0], [0], [1], [0, 0, 1, 1], [], []>} : vector<8x16xbf16>, vector<16x256xbf16>, vector<8x256xf32> -> vector<8x256xf32>
    %c0_3 = arith.constant 0 : index
    %c0_4 = arith.constant 0 : index
    %3 = vector.load %arg3[%c0_3, %c0_4] : memref<1x256xf32, #tpu.memory_space<vmem>>, vector<1x256xf32>
    %4 = vector.broadcast %3 : vector<1x256xf32> to vector<8x256xf32>
    %5 = arith.addf %2, %4 : vector<8x256xf32>
    %cst_5 = arith.constant 0.000000e+00 : f32
    %6 = vector.broadcast %cst_5 : f32 to vector<8x256xf32>
    %7 = arith.cmpf ogt, %5, %6 : vector<8x256xf32>
    %cst_6 = arith.constant 0.00999999977 : f32
    %8 = vector.broadcast %cst_6 : f32 to vector<8x256xf32>
    %9 = arith.mulf %8, %5 : vector<8x256xf32>
    %10 = arith.select %7, %5, %9 : vector<8x256xi1>, vector<8x256xf32>
    %11 = arith.truncf %10 : vector<8x256xf32> to vector<8x256xbf16>
    %c0_7 = arith.constant 0 : index
    %c0_8 = arith.constant 0 : index
    %12 = vector.load %arg4[%c0_7, %c0_8] : memref<256x256xbf16, #tpu.memory_space<vmem>>, vector<256x256xbf16>
    %cst_9 = arith.constant dense<0.000000e+00> : vector<8x256xf32>
    %13 = tpu.matmul %11, %12, %cst_9 {dimension_numbers = #tpu.dot_dimension_numbers<[1], [0], [0], [1], [0, 0, 1, 1], [], []>} : vector<8x256xbf16>, vector<256x256xbf16>, vector<8x256xf32> -> vector<8x256xf32>
    %c0_10 = arith.constant 0 : index
    %c0_11 = arith.constant 0 : index
    %14 = vector.load %arg5[%c0_10, %c0_11] : memref<1x256xf32, #tpu.memory_space<vmem>>, vector<1x256xf32>
    %15 = vector.broadcast %14 : vector<1x256xf32> to vector<8x256xf32>
    %16 = arith.addf %13, %15 : vector<8x256xf32>
    %cst_12 = arith.constant 0.000000e+00 : f32
    %17 = vector.broadcast %cst_12 : f32 to vector<8x256xf32>
    %18 = arith.cmpf ogt, %16, %17 : vector<8x256xf32>
    %cst_13 = arith.constant 0.00999999977 : f32
    %19 = vector.broadcast %cst_13 : f32 to vector<8x256xf32>
    %20 = arith.mulf %19, %16 : vector<8x256xf32>
    %21 = arith.select %18, %16, %20 : vector<8x256xi1>, vector<8x256xf32>
    %22 = arith.truncf %21 : vector<8x256xf32> to vector<8x256xbf16>
    %c0_14 = arith.constant 0 : index
    %c0_15 = arith.constant 0 : index
    %23 = vector.load %arg6[%c0_14, %c0_15] : memref<256x256xbf16, #tpu.memory_space<vmem>>, vector<256x256xbf16>
    %cst_16 = arith.constant dense<0.000000e+00> : vector<8x256xf32>
    %24 = tpu.matmul %22, %23, %cst_16 {dimension_numbers = #tpu.dot_dimension_numbers<[1], [0], [0], [1], [0, 0, 1, 1], [], []>} : vector<8x256xbf16>, vector<256x256xbf16>, vector<8x256xf32> -> vector<8x256xf32>
    %c0_17 = arith.constant 0 : index
    %c0_18 = arith.constant 0 : index
    %25 = vector.load %arg7[%c0_17, %c0_18] : memref<1x256xf32, #tpu.memory_space<vmem>>, vector<1x256xf32>
    %26 = vector.broadcast %25 : vector<1x256xf32> to vector<8x256xf32>
    %27 = arith.addf %24, %26 : vector<8x256xf32>
    %cst_19 = arith.constant 0.000000e+00 : f32
    %28 = vector.broadcast %cst_19 : f32 to vector<8x256xf32>
    %29 = arith.cmpf ogt, %27, %28 : vector<8x256xf32>
    %cst_20 = arith.constant 0.00999999977 : f32
    %30 = vector.broadcast %cst_20 : f32 to vector<8x256xf32>
    %31 = arith.mulf %30, %27 : vector<8x256xf32>
    %32 = arith.select %29, %27, %31 : vector<8x256xi1>, vector<8x256xf32>
    %33 = arith.truncf %32 : vector<8x256xf32> to vector<8x256xbf16>
    %c0_21 = arith.constant 0 : index
    %c0_22 = arith.constant 0 : index
    %34 = vector.load %arg8[%c0_21, %c0_22] : memref<256x128xbf16, #tpu.memory_space<vmem>>, vector<256x128xbf16>
    %cst_23 = arith.constant dense<0.000000e+00> : vector<8x128xf32>
    %35 = tpu.matmul %33, %34, %cst_23 {dimension_numbers = #tpu.dot_dimension_numbers<[1], [0], [0], [1], [0, 0, 1, 1], [], []>} : vector<8x256xbf16>, vector<256x128xbf16>, vector<8x128xf32> -> vector<8x128xf32>
    %c0_24 = arith.constant 0 : index
    %c0_25 = arith.constant 0 : index
    %36 = vector.load %arg9[%c0_24, %c0_25] : memref<1x128xf32, #tpu.memory_space<vmem>>, vector<1x128xf32>
    %37 = vector.broadcast %36 : vector<1x128xf32> to vector<8x128xf32>
    %38 = arith.addf %35, %37 : vector<8x128xf32>
    %cst_26 = arith.constant dense<0xFF800000> : vector<8xf32>
    %39 = vector.multi_reduction <maximumf>, %38, %cst_26 [1] : vector<8x128xf32> to vector<8xf32>
    %40 = vector.shape_cast %39 : vector<8xf32> to vector<8x1xf32>
    %41 = vector.broadcast %40 : vector<8x1xf32> to vector<8x128xf32>
    %42 = arith.subf %38, %41 : vector<8x128xf32>
    %43 = math.exp %42 : vector<8x128xf32>
    %cst_27 = arith.constant dense<0.000000e+00> : vector<8xf32>
    %44 = vector.multi_reduction <add>, %43, %cst_27 [1] : vector<8x128xf32> to vector<8xf32>
    %45 = vector.shape_cast %44 : vector<8xf32> to vector<8x1xf32>
    %46 = vector.broadcast %45 : vector<8x1xf32> to vector<8x128xf32>
    %47 = arith.divf %43, %46 : vector<8x128xf32>
    %48 = arith.truncf %47 : vector<8x128xf32> to vector<8x128xbf16>
    %c0_28 = arith.constant 0 : index
    %c0_29 = arith.constant 0 : index
    %49 = vector.load %arg10[%c0_28, %c0_29] : memref<8x128xbf16, #tpu.memory_space<vmem>>, vector<8x128xbf16>
    tpu.vector_store %arg10[%c0_28, %c0_29], %48 {strides = array<i32>} : memref<8x128xbf16, #tpu.memory_space<vmem>>, vector<8x128xbf16>,
    return
  }
  func.func @transform_0(%arg0: i32) -> (i32, i32) {
    %c0_i32 = arith.constant 0 : i32
    %c0_i32_0 = arith.constant 0 : i32
    return %arg0, %c0_i32 : i32, i32
  }
  func.func @transform_1(%arg0: i32) -> (i32, i32) {
    %c0_i32 = arith.constant 0 : i32
    %c0_i32_0 = arith.constant 0 : i32
    %c0_i32_1 = arith.constant 0 : i32
    return %c0_i32, %c0_i32_0 : i32, i32
  }
  func.func @transform_2(%arg0: i32) -> (i32, i32) {
    %c0_i32 = arith.constant 0 : i32
    %c0_i32_0 = arith.constant 0 : i32
    %c0_i32_1 = arith.constant 0 : i32
    return %c0_i32, %c0_i32_0 : i32, i32
  }
  func.func @transform_3(%arg0: i32) -> (i32, i32) {
    %c0_i32 = arith.constant 0 : i32
    %c0_i32_0 = arith.constant 0 : i32
    %c0_i32_1 = arith.constant 0 : i32
    return %c0_i32, %c0_i32_0 : i32, i32
  }
  func.func @transform_4(%arg0: i32) -> (i32, i32) {
    %c0_i32 = arith.constant 0 : i32
    %c0_i32_0 = arith.constant 0 : i32
    %c0_i32_1 = arith.constant 0 : i32
    return %c0_i32, %c0_i32_0 : i32, i32
  }
  func.func @transform_5(%arg0: i32) -> (i32, i32) {
    %c0_i32 = arith.constant 0 : i32
    %c0_i32_0 = arith.constant 0 : i32
    %c0_i32_1 = arith.constant 0 : i32
    return %c0_i32, %c0_i32_0 : i32, i32
  }
  func.func @transform_6(%arg0: i32) -> (i32, i32) {
    %c0_i32 = arith.constant 0 : i32
    %c0_i32_0 = arith.constant 0 : i32
    %c0_i32_1 = arith.constant 0 : i32
    return %c0_i32, %c0_i32_0 : i32, i32
  }
  func.func @transform_7(%arg0: i32) -> (i32, i32) {
    %c0_i32 = arith.constant 0 : i32
    %c0_i32_0 = arith.constant 0 : i32
    %c0_i32_1 = arith.constant 0 : i32
    return %c0_i32, %c0_i32_0 : i32, i32
  }
  func.func @transform_8(%arg0: i32) -> (i32, i32) {
    %c0_i32 = arith.constant 0 : i32
    %c0_i32_0 = arith.constant 0 : i32
    %c0_i32_1 = arith.constant 0 : i32
    return %c0_i32, %c0_i32_0 : i32, i32
  }
  func.func @transform_9(%arg0: i32) -> (i32, i32) {
    %c0_i32 = arith.constant 0 : i32
    %c0_i32_0 = arith.constant 0 : i32
    return %arg0, %c0_i32 : i32, i32
  }
}

module attributes {stable_mosaic.version = 11 : i64} {
  func.func @actor_mlp_kernel(%arg0: i32, %arg1: memref<8x16xbf16, #tpu.memory_space<vmem>>, %arg2: memref<16x256xbf16, #tpu.memory_space<vmem>>, %arg3: memref<1x256xf32, #tpu.memory_space<vmem>>, %arg4: memref<256x256xbf16, #tpu.memory_space<vmem>>, %arg5: memref<1x256xf32, #tpu.memory_space<vmem>>, %arg6: memref<256x256xbf16, #tpu.memory_space<vmem>>, %arg7: memref<1x256xf32, #tpu.memory_space<vmem>>, %arg8: memref<256x128xbf16, #tpu.memory_space<vmem>>, %arg9: memref<1x128xf32, #tpu.memory_space<vmem>>, %arg10: memref<8x128xbf16, #tpu.memory_space<vmem>>) attributes {dimension_semantics = [#tpu.dimension_semantics<parallel>], iteration_bounds = array<i64: 1>, scalar_prefetch = 0 : i64, scratch_operands = 0 : i64, tpu.core_type = #tpu.core_type<tc>, window_params = [{transform_indices = @transform_0, window_bounds = array<i64: 8, 16>}, {pipeline_mode = #tpu.pipeline_mode<synchronous>, transform_indices = @transform_1, window_bounds = array<i64: 16, 256>}, {pipeline_mode = #tpu.pipeline_mode<synchronous>, transform_indices = @transform_2, window_bounds = array<i64: 1, 256>}, {pipeline_mode = #tpu.pipeline_mode<synchronous>, transform_indices = @transform_3, window_bounds = array<i64: 256, 256>}, {pipeline_mode = #tpu.pipeline_mode<synchronous>, transform_indices = @transform_4, window_bounds = array<i64: 1, 256>}, {pipeline_mode = #tpu.pipeline_mode<synchronous>, transform_indices = @transform_5, window_bounds = array<i64: 256, 256>}, {pipeline_mode = #tpu.pipeline_mode<synchronous>, transform_indices = @transform_6, window_bounds = array<i64: 1, 256>}, {pipeline_mode = #tpu.pipeline_mode<synchronous>, transform_indices = @transform_7, window_bounds = array<i64: 256, 128>}, {pipeline_mode = #tpu.pipeline_mode<synchronous>, transform_indices = @transform_8, window_bounds = array<i64: 1, 128>}, {transform_indices = @transform_9, window_bounds = array<i64: 8, 128>}]} {
    %c0 = arith.constant 0 : index
    %c0_0 = arith.constant 0 : index
    %0 = vector.load %arg1[%c0, %c0_0] : memref<8x16xbf16, #tpu.memory_space<vmem>>, vector<8x16xbf16>
    %c0_1 = arith.constant 0 : index
    %c0_2 = arith.constant 0 : index
    %1 = vector.load %arg2[%c0_1, %c0_2] : memref<16x256xbf16, #tpu.memory_space<vmem>>, vector<16x256xbf16>
    %cst = arith.constant dense<0.000000e+00> : vector<8x256xf32>
    %2 = tpu.matmul %0, %1, %cst {dimension_numbers = #tpu.dot_dimension_numbers<[1], [0], [0], [1], [0, 0, 1, 1], [], []>} : vector<8x16xbf16>, vector<16x256xbf16>, vector<8x256xf32> -> vector<8x256xf32>
    %c0_3 = arith.constant 0 : index
    %c0_4 = arith.constant 0 : index
    %3 = vector.load %arg3[%c0_3, %c0_4] : memref<1x256xf32, #tpu.memory_space<vmem>>, vector<1x256xf32>
    %4 = vector.broadcast %3 : vector<1x256xf32> to vector<8x256xf32>
    %5 = arith.addf %2, %4 : vector<8x256xf32>
    %cst_5 = arith.constant 0.000000e+00 : f32
    %6 = vector.broadcast %cst_5 : f32 to vector<8x256xf32>
    %7 = arith.cmpf ogt, %5, %6 : vector<8x256xf32>
    %cst_6 = arith.constant 0.00999999977 : f32
    %8 = vector.broadcast %cst_6 : f32 to vector<8x256xf32>
    %9 = arith.mulf %8, %5 : vector<8x256xf32>
    %10 = arith.select %7, %5, %9 : vector<8x256xi1>, vector<8x256xf32>
    %11 = arith.truncf %10 : vector<8x256xf32> to vector<8x256xbf16>
    %c0_7 = arith.constant 0 : index
    %c0_8 = arith.constant 0 : index
    %12 = vector.load %arg4[%c0_7, %c0_8] : memref<256x256xbf16, #tpu.memory_space<vmem>>, vector<256x256xbf16>
    %cst_9 = arith.constant dense<0.000000e+00> : vector<8x256xf32>
    %13 = tpu.matmul %11, %12, %cst_9 {dimension_numbers = #tpu.dot_dimension_numbers<[1], [0], [0], [1], [0, 0, 1, 1], [], []>} : vector<8x256xbf16>, vector<256x256xbf16>, vector<8x256xf32> -> vector<8x256xf32>
    %c0_10 = arith.constant 0 : index
    %c0_11 = arith.constant 0 : index
    %14 = vector.load %arg5[%c0_10, %c0_11] : memref<1x256xf32, #tpu.memory_space<vmem>>, vector<1x256xf32>
    %15 = vector.broadcast %14 : vector<1x256xf32> to vector<8x256xf32>
    %16 = arith.addf %13, %15 : vector<8x256xf32>
    %cst_12 = arith.constant 0.000000e+00 : f32
    %17 = vector.broadcast %cst_12 : f32 to vector<8x256xf32>
    %18 = arith.cmpf ogt, %16, %17 : vector<8x256xf32>
    %cst_13 = arith.constant 0.00999999977 : f32
    %19 = vector.broadcast %cst_13 : f32 to vector<8x256xf32>
    %20 = arith.mulf %19, %16 : vector<8x256xf32>
    %21 = arith.select %18, %16, %20 : vector<8x256xi1>, vector<8x256xf32>
    %22 = arith.truncf %21 : vector<8x256xf32> to vector<8x256xbf16>
    %c0_14 = arith.constant 0 : index
    %c0_15 = arith.constant 0 : index
    %23 = vector.load %arg6[%c0_14, %c0_15] : memref<256x256xbf16, #tpu.memory_space<vmem>>, vector<256x256xbf16>
    %cst_16 = arith.constant dense<0.000000e+00> : vector<8x256xf32>
    %24 = tpu.matmul %22, %23, %cst_16 {dimension_numbers = #tpu.dot_dimension_numbers<[1], [0], [0], [1], [0, 0, 1, 1], [], []>} : vector<8x256xbf16>, vector<256x256xbf16>, vector<8x256xf32> -> vector<8x256xf32>
    %c0_17 = arith.constant 0 : index
    %c0_18 = arith.constant 0 : index
    %25 = vector.load %arg7[%c0_17, %c0_18] : memref<1x256xf32, #tpu.memory_space<vmem>>, vector<1x256xf32>
    %26 = vector.broadcast %25 : vector<1x256xf32> to vector<8x256xf32>
    %27 = arith.addf %24, %26 : vector<8x256xf32>
    %cst_19 = arith.constant 0.000000e+00 : f32
    %28 = vector.broadcast %cst_19 : f32 to vector<8x256xf32>
    %29 = arith.cmpf ogt, %27, %28 : vector<8x256xf32>
    %cst_20 = arith.constant 0.00999999977 : f32
    %30 = vector.broadcast %cst_20 : f32 to vector<8x256xf32>
    %31 = arith.mulf %30, %27 : vector<8x256xf32>
    %32 = arith.select %29, %27, %31 : vector<8x256xi1>, vector<8x256xf32>
    %33 = arith.truncf %32 : vector<8x256xf32> to vector<8x256xbf16>
    %c0_21 = arith.constant 0 : index
    %c0_22 = arith.constant 0 : index
    %34 = vector.load %arg8[%c0_21, %c0_22] : memref<256x128xbf16, #tpu.memory_space<vmem>>, vector<256x128xbf16>
    %cst_23 = arith.constant dense<0.000000e+00> : vector<8x128xf32>
    %35 = tpu.matmul %33, %34, %cst_23 {dimension_numbers = #tpu.dot_dimension_numbers<[1], [0], [0], [1], [0, 0, 1, 1], [], []>} : vector<8x256xbf16>, vector<256x128xbf16>, vector<8x128xf32> -> vector<8x128xf32>
    %c0_24 = arith.constant 0 : index
    %c0_25 = arith.constant 0 : index
    %36 = vector.load %arg9[%c0_24, %c0_25] : memref<1x128xf32, #tpu.memory_space<vmem>>, vector<1x128xf32>
    %37 = vector.broadcast %36 : vector<1x128xf32> to vector<8x128xf32>
    %38 = arith.addf %35, %37 : vector<8x128xf32>
    %cst_26 = arith.constant dense<0xFF800000> : vector<8xf32>
    %39 = vector.multi_reduction <maximumf>, %38, %cst_26 [1] : vector<8x128xf32> to vector<8xf32>
    %40 = vector.shape_cast %39 : vector<8xf32> to vector<8x1xf32>
    %41 = vector.broadcast %40 : vector<8x1xf32> to vector<8x128xf32>
    %42 = arith.subf %38, %41 : vector<8x128xf32>
    %43 = math.exp %42 : vector<8x128xf32>
    %cst_27 = arith.constant dense<0.000000e+00> : vector<8xf32>
    %44 = vector.multi_reduction <add>, %43, %cst_27 [1] : vector<8x128xf32> to vector<8xf32>
    %45 = vector.shape_cast %44 : vector<8xf32> to vector<8x1xf32>
    %46 = vector.broadcast %45 : vector<8x1xf32> to vector<8x128xf32>
    %47 = arith.divf %43, %46 : vector<8x128xf32>
    %48 = arith.truncf %47 : vector<8x128xf32> to vector<8x128xbf16>
    %c0_28 = arith.constant 0 : index
    %c0_29 = arith.constant 0 : index
    %49 = vector.load %arg10[%c0_28, %c0_29] : memref<8x128xbf16, #tpu.memory_space<vmem>>, vector<8x128xbf16>
    tpu.vector_store %arg10[%c0_28, %c0_29], %48 {strides = array<i32>} : memref<8x128xbf16, #tpu.memory_space<vmem>>, vector<8x128xbf16>,
    return
  }
  func.func @transform_0(%arg0: i32) -> (i32, i32) {
    %c0_i32 = arith.constant 0 : i32
    %c0_i32_0 = arith.constant 0 : i32
    return %arg0, %c0_i32 : i32, i32
  }
  func.func @transform_1(%arg0: i32) -> (i32, i32) {
    %c0_i32 = arith.constant 0 : i32
    %c0_i32_0 = arith.constant 0 : i32
    %c0_i32_1 = arith.constant 0 : i32
    return %c0_i32, %c0_i32_0 : i32, i32
  }
  func.func @transform_2(%arg0: i32) -> (i32, i32) {
    %c0_i32 = arith.constant 0 : i32
    %c0_i32_0 = arith.constant 0 : i32
    %c0_i32_1 = arith.constant 0 : i32
    return %c0_i32, %c0_i32_0 : i32, i32
  }
  func.func @transform_3(%arg0: i32) -> (i32, i32) {
    %c0_i32 = arith.constant 0 : i32
    %c0_i32_0 = arith.constant 0 : i32
    %c0_i32_1 = arith.constant 0 : i32
    return %c0_i32, %c0_i32_0 : i32, i32
  }
  func.func @transform_4(%arg0: i32) -> (i32, i32) {
    %c0_i32 = arith.constant 0 : i32
    %c0_i32_0 = arith.constant 0 : i32
    %c0_i32_1 = arith.constant 0 : i32
    return %c0_i32, %c0_i32_0 : i32, i32
  }
  func.func @transform_5(%arg0: i32) -> (i32, i32) {
    %c0_i32 = arith.constant 0 : i32
    %c0_i32_0 = arith.constant 0 : i32
    %c0_i32_1 = arith.constant 0 : i32
    return %c0_i32, %c0_i32_0 : i32, i32
  }
  func.func @transform_6(%arg0: i32) -> (i32, i32) {
    %c0_i32 = arith.constant 0 : i32
    %c0_i32_0 = arith.constant 0 : i32
    %c0_i32_1 = arith.constant 0 : i32
    return %c0_i32, %c0_i32_0 : i32, i32
  }
  func.func @transform_7(%arg0: i32) -> (i32, i32) {
    %c0_i32 = arith.constant 0 : i32
    %c0_i32_0 = arith.constant 0 : i32
    %c0_i32_1 = arith.constant 0 : i32
    return %c0_i32, %c0_i32_0 : i32, i32
  }
  func.func @transform_8(%arg0: i32) -> (i32, i32) {
    %c0_i32 = arith.constant 0 : i32
    %c0_i32_0 = arith.constant 0 : i32
    %c0_i32_1 = arith.constant 0 : i32
    return %c0_i32, %c0_i32_0 : i32, i32
  }
  func.func @transform_9(%arg0: i32) -> (i32, i32) {
    %c0_i32 = arith.constant 0 : i32
    %c0_i32_0 = arith.constant 0 : i32
    return %arg0, %c0_i32 : i32, i32
  }
}

</mosaic_0001>

<llo_original>
// kernel: tpu_custom_call.1
$region0: #{tpu_custom_call.1}
  #allocation0 [shape = 'u32[]', space=smem, size = 0x4, offset = 0x4, fixed_abs, tag = 'smem constant byte address 0x4 - core index']
  #allocation1 [shape = 'u32[144,128]{1,0:T(1,128)}', space=vmem, size = 0x12000, scoped, tag = 'internal scratch']
  %s0 = inlined_call_operand.hbm [shape: bf16[8,16], index: 0, kind: input, shape index: {}]
  %s1 = inlined_call_operand.hbm [shape: bf16[16,256], index: 1, kind: input, shape index: {}]
  %s2 = inlined_call_operand.vmem [shape: f32[1,256], index: 2, kind: input, shape index: {}]
  %s3 = inlined_call_operand.hbm [shape: bf16[256,256], index: 3, kind: input, shape index: {}]
  %s4 = inlined_call_operand.vmem [shape: f32[1,256], index: 4, kind: input, shape index: {}]
  %s5 = inlined_call_operand.hbm [shape: bf16[256,256], index: 5, kind: input, shape index: {}]
  %s6 = inlined_call_operand.vmem [shape: f32[1,256], index: 6, kind: input, shape index: {}]
  %s7 = inlined_call_operand.hbm [shape: bf16[256,128], index: 7, kind: input, shape index: {}]
  %s8 = inlined_call_operand.vmem [shape: f32[1,128], index: 8, kind: input, shape index: {}]
  %s9 = inlined_call_operand.hbm [shape: bf16[8,128], index: 9, kind: output, shape index: {}]
  %s10 = sld [smem:[#allocation0]]
  $region66: #{tpu_custom_call.1} parent=0
    _
  %s12 = ssub.s32 1, %s10
  %s13 = scalar_select 0, %s12, %s10
  $region1: #{tpu_custom_call.1} parent=0
    #allocation2 [shape = 'u8[2048]{0}', space=vmem, size = 0x800, scoped, tag = 'input window, operand 0, single buffered']
    #allocation3 [shape = 's32[1]{0}', space=sflag, size = 0x4, scoped, tag = 'scoped memory for tpu_custom_call.1']
    #allocation4 [shape = 's32[1]{0}', space=sflag, size = 0x4, scoped, tag = 'scoped memory for tpu_custom_call.1']
    #allocation5 [shape = 'u8[8192]{0}', space=vmem, size = 0x2000, scoped, tag = 'input window, operand 1, single buffered']
    #allocation6 [shape = 's32[1]{0}', space=sflag, size = 0x4, scoped, tag = 'scoped memory for tpu_custom_call.1']
    #allocation7 [shape = 'u8[131072]{0}', space=vmem, size = 0x20000, scoped, tag = 'input window, operand 3, single buffered']
    #allocation8 [shape = 'u8[131072]{0}', space=vmem, size = 0x20000, scoped, tag = 'input window, operand 5, single buffered']
    #allocation9 [shape = 's32[1]{0}', space=sflag, size = 0x4, scoped, tag = 'scoped memory for tpu_custom_call.1']
    #allocation10 [shape = 'u8[65536]{0}', space=vmem, size = 0x10000, scoped, tag = 'input window, operand 7, single buffered']
    #allocation11 [shape = 'u8[2048]{0}', space=vmem, size = 0x800, scoped, tag = 'output window, operand 0, single buffered']
    %14 = vsyncpa [#allocation3], 0
    %15 = vsyncpa [#allocation6], 0
    %16 = vsyncpa [#allocation9], 0
    %17 = vsyncpa [#allocation4], 0
    // Predicated region
    $region2: #{tpu_custom_call.1} parent=1 // pred_check
      _
    $region3: #{tpu_custom_call.1} parent=1 // pred_check_branch
      %19 = sbr.rel (0) target = $region5
    $region4: #{tpu_custom_call.1} parent=1 // pred_region
      %s21 = ssub.s32 64, 64
      %22 = vsyncadd [#allocation3], %s21
      %s24 = sshll.u32 [#allocation2], 4
      %s25 = int_to_ptr.vmem [resolvable:$true] %s24
      %27 = dma.hbm_to_vmem [thread:$0]  %s0, 64, %s25, [#allocation3]
    $region5: #{tpu_custom_call.1} parent=1 // pred_fallthru
      _
    // Predicated region
    $region6: #{tpu_custom_call.1} parent=1 // pred_check
      _
    $region7: #{tpu_custom_call.1} parent=1 // pred_check_branch
      %29 = sbr.rel (0) target = $region9
    $region8: #{tpu_custom_call.1} parent=1 // pred_region
      %s31 = ssub.s32 256, 256
      %32 = vsyncadd [#allocation6], %s31
      %s33 = sshll.u32 [#allocation5], 4
      %s34 = int_to_ptr.vmem [resolvable:$true] %s33
      %39 = dma.hbm_to_vmem [thread:$0]  %s1, 256, %s34, [#allocation6], 128, 128, 8
    $region9: #{tpu_custom_call.1} parent=1 // pred_fallthru
      _
    // Predicated region
    $region10: #{tpu_custom_call.1} parent=1 // pred_check
      _
    $region11: #{tpu_custom_call.1} parent=1 // pred_check_branch
      %41 = sbr.rel (0) target = $region13
    $region12: #{tpu_custom_call.1} parent=1 // pred_region
      _
    $region13: #{tpu_custom_call.1} parent=1 // pred_fallthru
      _
    // Predicated region
    $region14: #{tpu_custom_call.1} parent=1 // pred_check
      _
    $region15: #{tpu_custom_call.1} parent=1 // pred_check_branch
      %43 = sbr.rel (0) target = $region17
    $region16: #{tpu_custom_call.1} parent=1 // pred_region
      %s45 = ssub.s32 4096, 4096
      %46 = vsyncadd [#allocation6], %s45
      %s47 = sshll.u32 [#allocation7], 4
      %s48 = int_to_ptr.vmem [resolvable:$true] %s47
      %53 = dma.hbm_to_vmem [thread:$0]  %s3, 4096, %s48, [#allocation6], 128, 128, 8
    $region17: #{tpu_custom_call.1} parent=1 // pred_fallthru
      _
    // Predicated region
    $region18: #{tpu_custom_call.1} parent=1 // pred_check
      _
    $region19: #{tpu_custom_call.1} parent=1 // pred_check_branch
      %55 = sbr.rel (0) target = $region21
    $region20: #{tpu_custom_call.1} parent=1 // pred_region
      _
    $region21: #{tpu_custom_call.1} parent=1 // pred_fallthru
      _
    // Predicated region
    $region22: #{tpu_custom_call.1} parent=1 // pred_check
      _
    $region23: #{tpu_custom_call.1} parent=1 // pred_check_branch
      %57 = sbr.rel (0) target = $region25
    $region24: #{tpu_custom_call.1} parent=1 // pred_region
      %s59 = ssub.s32 4096, 4096
      %60 = vsyncadd [#allocation9], %s59
      %s61 = sshll.u32 [#allocation8], 4
      %s62 = int_to_ptr.vmem [resolvable:$true] %s61
      %67 = dma.hbm_to_vmem [thread:$0]  %s5, 4096, %s62, [#allocation9], 128, 128, 8
    $region25: #{tpu_custom_call.1} parent=1 // pred_fallthru
      _
    // Predicated region
    $region26: #{tpu_custom_call.1} parent=1 // pred_check
      _
    $region27: #{tpu_custom_call.1} parent=1 // pred_check_branch
      %69 = sbr.rel (0) target = $region29
    $region28: #{tpu_custom_call.1} parent=1 // pred_region
      _
    $region29: #{tpu_custom_call.1} parent=1 // pred_fallthru
      _
    // Predicated region
    $region30: #{tpu_custom_call.1} parent=1 // pred_check
      _
    $region31: #{tpu_custom_call.1} parent=1 // pred_check_branch
      %71 = sbr.rel (0) target = $region33
    $region32: #{tpu_custom_call.1} parent=1 // pred_region
      %s73 = ssub.s32 2048, 2048
      %74 = vsyncadd [#allocation9], %s73
      %s75 = sshll.u32 [#allocation10], 4
      %s76 = int_to_ptr.vmem [resolvable:$true] %s75
      %81 = dma.hbm_to_vmem [thread:$0]  %s7, 2048, %s76, [#allocation9], 64, 64, 4
    $region33: #{tpu_custom_call.1} parent=1 // pred_fallthru
      _
    // Predicated region
    $region34: #{tpu_custom_call.1} parent=1 // pred_check
      _
    $region35: #{tpu_custom_call.1} parent=1 // pred_check_branch
      %83 = sbr.rel (0) target = $region37
    $region36: #{tpu_custom_call.1} parent=1 // pred_region
      _
    $region37: #{tpu_custom_call.1} parent=1 // pred_fallthru
      _
    // Predicated region
    $region38: #{tpu_custom_call.1} parent=1 // pred_check
      _
    $region39: #{tpu_custom_call.1} parent=1 // pred_check_branch
      %85 = sbr.rel (0) target = $region41
    $region40: #{tpu_custom_call.1} parent=1 // pred_region
      %86 = dma.done [#allocation3], 64
    $region41: #{tpu_custom_call.1} parent=1 // pred_fallthru
      _
    // Predicated region
    $region42: #{tpu_custom_call.1} parent=1 // pred_check
      _
    $region43: #{tpu_custom_call.1} parent=1 // pred_check_branch
      %88 = sbr.rel (0) target = $region45
    $region44: #{tpu_custom_call.1} parent=1 // pred_region
      %89 = dma.done [#allocation6], 256
    $region45: #{tpu_custom_call.1} parent=1 // pred_fallthru
      _
    // Predicated region
    $region46: #{tpu_custom_call.1} parent=1 // pred_check
      _
    $region47: #{tpu_custom_call.1} parent=1 // pred_check_branch
      %91 = sbr.rel (0) target = $region49
    $region48: #{tpu_custom_call.1} parent=1 // pred_region
      %92 = dma.done [#allocation6], 4096
    $region49: #{tpu_custom_call.1} parent=1 // pred_fallthru
      _
    // Predicated region
    $region50: #{tpu_custom_call.1} parent=1 // pred_check
      _
    $region51: #{tpu_custom_call.1} parent=1 // pred_check_branch
      %94 = sbr.rel (0) target = $region53
    $region52: #{tpu_custom_call.1} parent=1 // pred_region
      %95 = dma.done [#allocation9], 4096
    $region53: #{tpu_custom_call.1} parent=1 // pred_fallthru
      _
    // Predicated region
    $region54: #{tpu_custom_call.1} parent=1 // pred_check
      _
    $region55: #{tpu_custom_call.1} parent=1 // pred_check_branch
      %97 = sbr.rel (0) target = $region57
    $region56: #{tpu_custom_call.1} parent=1 // pred_region
      %98 = dma.done [#allocation9], 2048
    $region57: #{tpu_custom_call.1} parent=1 // pred_fallthru
      _
    %v100 = vld [vmem:[#allocation2] sm:$0xf]
    %v101 = vld [vmem:[#allocation5] sm:$0xff]
    %v102 = vld [vmem:[#allocation5 + $0x8] sm:$0xff]
    %v103 = vld [vmem:[%s2] sm:$0x3]
    %v105 = vlaneseq
    %v106 = vshrl.u32 %v105, 7
    %v107 = vsub.s32 0, %v106
    %v108 = vrot.slane %v103, %v107
    %v109 = vlaneseq
    %v110 = vshrl.u32 %v109, 7
    %v111 = vsub.s32 1, %v110
    %v112 = vrot.slane %v103, %v111
    %v117 = vunpack.c.l.b16 %v101
    %v118 = vunpack.c.h.b16 %v101
    %v119 = vunpack.c.l.b16 %v102
    %v120 = vunpack.c.h.b16 %v102
    %v121 = vpack.c.b16 %v119, %v117
    %v122 = vpack.c.b16 %v120, %v118
    %vm125 = vcmask 130048
    %v127 = vsel %vm125, %v100, 0
    %129 = vmatprep.subr.bf16.mxu0 0
    %130 = vmatpush1.bf16.msra.mxu0 0
    %131 = vmatprep.subr.bf16.mxu0 0
    %132 = vmatpush1.bf16.msra.mxu0 0
    %133 = vmatprep.subr.bf16.mxu0 0
    %134 = vmatpush1.bf16.msra.mxu0 0
    %135 = vmatprep.subr.bf16.mxu0 0
    %136 = vmatpush1.bf16.msra.mxu0 0
    %137 = vmatprep.subr.bf16.mxu0 0
    %138 = vmatpush1.bf16.msra.mxu0 0
    %139 = vmatprep.subr.bf16.mxu0 0
    %140 = vmatpush1.bf16.msra.mxu0 0
    %141 = vmatprep.subr.bf16.mxu0 0
    %142 = vmatpush1.bf16.msra.mxu0 0
    %143 = vmatprep.subr.bf16.mxu0 %v122
    %144 = vmatpush1.bf16.msra.mxu0 %v121
    %145 = vmatprep.subr.bf16.mxu0 0
    %146 = vmatpush2.bf16.msra.mxu0 0
    %147 = vmatprep.subr.bf16.mxu0 0
    %148 = vmatpush2.bf16.msra.mxu0 0
    %149 = vmatprep.subr.bf16.mxu0 0
    %150 = vmatpush2.bf16.msra.mxu0 0
    %151 = vmatprep.subr.bf16.mxu0 0
    %152 = vmatpush2.bf16.msra.mxu0 0
    %153 = vmatprep.subr.bf16.mxu0 0
    %154 = vmatpush2.bf16.msra.mxu0 0
    %155 = vmatprep.subr.bf16.mxu0 0
    %156 = vmatpush2.bf16.msra.mxu0 0
    %157 = vmatprep.subr.bf16.mxu0 0
    %158 = vmatpush2.bf16.msra.mxu0 0
    %159 = vmatprep.subr.bf16.mxu0 0
    %160 = vmatpush2.bf16.msra.mxu0 0
    %161 = vmatprep.mubr.bf16.mxu0 0
    %162 = vmatmul.mubr.bf16.gmra.mxu0 %v127
    %v163 = vpop.f32.mrf.mxu0
    %v164 = vadd.f32 %v108, %v163
    %v165 = vpop.f32.mrf.mxu0
    %v166 = vadd.f32 %v112, %v165
    %v167 = vpop.f32.mrf.mxu0
    %v168 = vpop.f32.mrf.mxu0
    %169 = vdwg.mxu0
    %vm170 = vcmp.gt.f32.partialorder %v164, 0.0
    %vm171 = vcmp.gt.f32.partialorder %v166, 0.0
    %v172 = vmul.f32 %v164, 0.01
    %v173 = vmul.f32 %v166, 0.01
    %v174 = vsel %vm170, %v164, %v172
    %v175 = vsel %vm171, %v166, %v173
    %v176 = vpack.c.bf16 %v174, %v174
    %v177 = vpack.c.bf16 %v175, %v175
    %v178 = vld [vmem:[#allocation7] sm:$0xff]
    %v179 = vld [vmem:[#allocation7 + $0x8] sm:$0xff]
    %v180 = vld [vmem:[#allocation7 + $0x10] sm:$0xff]
    %v181 = vld [vmem:[#allocation7 + $0x18] sm:$0xff]
    %v182 = vld [vmem:[#allocation7 + $0x20] sm:$0xff]
    %v183 = vld [vmem:[#allocation7 + $0x28] sm:$0xff]
    %v184 = vld [vmem:[#allocation7 + $0x30] sm:$0xff]
    %v185 = vld [vmem:[#allocation7 + $0x38] sm:$0xff]
    %v186 = vld [vmem:[#allocation7 + $0x40] sm:$0xff]
    %v187 = vld [vmem:[#allocation7 + $0x48] sm:$0xff]
    %v188 = vld [vmem:[#allocation7 + $0x50] sm:$0xff]
    %v189 = vld [vmem:[#allocation7 + $0x58] sm:$0xff]
    %v190 = vld [vmem:[#allocation7 + $0x60] sm:$0xff]
    %v191 = vld [vmem:[#allocation7 + $0x68] sm:$0xff]
    %v192 = vld [vmem:[#allocation7 + $0x70] sm:$0xff]
    %v193 = vld [vmem:[#allocation7 + $0x78] sm:$0xff]
    %v194 = vld [vmem:[#allocation7 + $0x80] sm:$0xff]
    %v195 = vld [vmem:[#allocation7 + $0x88] sm:$0xff]
    %v196 = vld [vmem:[#allocation7 + $0x90] sm:$0xff]
    %v197 = vld [vmem:[#allocation7 + $0x98] sm:$0xff]
    %v198 = vld [vmem:[#allocation7 + $0xa0] sm:$0xff]
    %v199 = vld [vmem:[#allocation7 + $0xa8] sm:$0xff]
    %v200 = vld [vmem:[#allocation7 + $0xb0] sm:$0xff]
    %v201 = vld [vmem:[#allocation7 + $0xb8] sm:$0xff]
    %v202 = vld [vmem:[#allocation7 + $0xc0] sm:$0xff]
    %v203 = vld [vmem:[#allocation7 + $0xc8] sm:$0xff]
    %v204 = vld [vmem:[#allocation7 + $0xd0] sm:$0xff]
    %v205 = vld [vmem:[#allocation7 + $0xd8] sm:$0xff]
    %v206 = vld [vmem:[#allocation7 + $0xe0] sm:$0xff]
    %v207 = vld [vmem:[#allocation7 + $0xe8] sm:$0xff]
    %v208 = vld [vmem:[#allocation7 + $0xf0] sm:$0xff]
    %v209 = vld [vmem:[#allocation7 + $0xf8] sm:$0xff]
    %v210 = vld [vmem:[%s4] sm:$0x3]
    %v212 = vlaneseq
    %v213 = vshrl.u32 %v212, 7
    %v214 = vsub.s32 0, %v213
    %v215 = vrot.slane %v210, %v214
    %v216 = vlaneseq
    %v217 = vshrl.u32 %v216, 7
    %v218 = vsub.s32 1, %v217
    %v219 = vrot.slane %v210, %v218
    %v254 = vunpack.c.l.b16 %v178
    %v255 = vunpack.c.h.b16 %v178
    %v256 = vunpack.c.l.b16 %v179
    %v257 = vunpack.c.h.b16 %v179
    %v258 = vunpack.c.l.b16 %v180
    %v259 = vunpack.c.h.b16 %v180
    %v260 = vunpack.c.l.b16 %v181
    %v261 = vunpack.c.h.b16 %v181
    %v262 = vunpack.c.l.b16 %v182
    %v263 = vunpack.c.h.b16 %v182
    %v264 = vunpack.c.l.b16 %v183
    %v265 = vunpack.c.h.b16 %v183
    %v266 = vunpack.c.l.b16 %v184
    %v267 = vunpack.c.h.b16 %v184
    %v268 = vunpack.c.l.b16 %v185
    %v269 = vunpack.c.h.b16 %v185
    %v270 = vunpack.c.l.b16 %v186
    %v271 = vunpack.c.h.b16 %v186
    %v272 = vunpack.c.l.b16 %v187
    %v273 = vunpack.c.h.b16 %v187
    %v274 = vunpack.c.l.b16 %v188
    %v275 = vunpack.c.h.b16 %v188
    %v276 = vunpack.c.l.b16 %v189
    %v277 = vunpack.c.h.b16 %v189
    %v278 = vunpack.c.l.b16 %v190
    %v279 = vunpack.c.h.b16 %v190
    %v280 = vunpack.c.l.b16 %v191
    %v281 = vunpack.c.h.b16 %v191
    %v282 = vunpack.c.l.b16 %v192
    %v283 = vunpack.c.h.b16 %v192
    %v284 = vunpack.c.l.b16 %v193
    %v285 = vunpack.c.h.b16 %v193
    %v286 = vunpack.c.l.b16 %v194
    %v287 = vunpack.c.h.b16 %v194
    %v288 = vunpack.c.l.b16 %v195
    %v289 = vunpack.c.h.b16 %v195
    %v290 = vunpack.c.l.b16 %v196
    %v291 = vunpack.c.h.b16 %v196
    %v292 = vunpack.c.l.b16 %v197
    %v293 = vunpack.c.h.b16 %v197
    %v294 = vunpack.c.l.b16 %v198
    %v295 = vunpack.c.h.b16 %v198
    %v296 = vunpack.c.l.b16 %v199
    %v297 = vunpack.c.h.b16 %v199
    %v298 = vunpack.c.l.b16 %v200
    %v299 = vunpack.c.h.b16 %v200
    %v300 = vunpack.c.l.b16 %v201
    %v301 = vunpack.c.h.b16 %v201
    %v302 = vunpack.c.l.b16 %v202
    %v303 = vunpack.c.h.b16 %v202
    %v304 = vunpack.c.l.b16 %v203
    %v305 = vunpack.c.h.b16 %v203
    %v306 = vunpack.c.l.b16 %v204
    %v307 = vunpack.c.h.b16 %v204
    %v308 = vunpack.c.l.b16 %v205
    %v309 = vunpack.c.h.b16 %v205
    %v310 = vunpack.c.l.b16 %v206
    %v311 = vunpack.c.h.b16 %v206
    %v312 = vunpack.c.l.b16 %v207
    %v313 = vunpack.c.h.b16 %v207
    %v314 = vunpack.c.l.b16 %v208
    %v315 = vunpack.c.h.b16 %v208
    %v316 = vunpack.c.l.b16 %v209
    %v317 = vunpack.c.h.b16 %v209
    %v318 = vpack.c.b16 %v256, %v254
    %v319 = vpack.c.b16 %v257, %v255
    %v320 = vpack.c.b16 %v260, %v258
    %v321 = vpack.c.b16 %v261, %v259
    %v322 = vpack.c.b16 %v264, %v262
    %v323 = vpack.c.b16 %v265, %v263
    %v324 = vpack.c.b16 %v268, %v266
    %v325 = vpack.c.b16 %v269, %v267
    %v326 = vpack.c.b16 %v272, %v270
    %v327 = vpack.c.b16 %v273, %v271
    %v328 = vpack.c.b16 %v276, %v274
    %v329 = vpack.c.b16 %v277, %v275
    %v330 = vpack.c.b16 %v280, %v278
    %v331 = vpack.c.b16 %v281, %v279
    %v332 = vpack.c.b16 %v284, %v282
    %v333 = vpack.c.b16 %v285, %v283
    %v334 = vpack.c.b16 %v288, %v286
    %v335 = vpack.c.b16 %v289, %v287
    %v336 = vpack.c.b16 %v292, %v290
    %v337 = vpack.c.b16 %v293, %v291
    %v338 = vpack.c.b16 %v296, %v294
    %v339 = vpack.c.b16 %v297, %v295
    %v340 = vpack.c.b16 %v300, %v298
    %v341 = vpack.c.b16 %v301, %v299
    %v342 = vpack.c.b16 %v304, %v302
    %v343 = vpack.c.b16 %v305, %v303
    %v344 = vpack.c.b16 %v308, %v306
    %v345 = vpack.c.b16 %v309, %v307
    %v346 = vpack.c.b16 %v312, %v310
    %v347 = vpack.c.b16 %v313, %v311
    %v348 = vpack.c.b16 %v316, %v314
    %v349 = vpack.c.b16 %v317, %v315
    %382 = vmatprep.subr.bf16.mxu0 %v333
    %383 = vmatpush1.bf16.msra.mxu0 %v332
    %384 = vmatprep.subr.bf16.mxu0 %v331
    %385 = vmatpush1.bf16.msra.mxu0 %v330
    %386 = vmatprep.subr.bf16.mxu0 %v329
    %387 = vmatpush1.bf16.msra.mxu0 %v328
    %388 = vmatprep.subr.bf16.mxu0 %v327
    %389 = vmatpush1.bf16.msra.mxu0 %v326
    %390 = vmatprep.subr.bf16.mxu0 %v325
    %391 = vmatpush1.bf16.msra.mxu0 %v324
    %392 = vmatprep.subr.bf16.mxu0 %v323
    %393 = vmatpush1.bf16.msra.mxu0 %v322
    %394 = vmatprep.subr.bf16.mxu0 %v321
    %395 = vmatpush1.bf16.msra.mxu0 %v320
    %396 = vmatprep.subr.bf16.mxu0 %v319
    %397 = vmatpush1.bf16.msra.mxu0 %v318
    %398 = vmatprep.subr.bf16.mxu0 %v349
    %399 = vmatpush2.bf16.msra.mxu0 %v348
    %400 = vmatprep.subr.bf16.mxu0 %v347
    %401 = vmatpush2.bf16.msra.mxu0 %v346
    %402 = vmatprep.subr.bf16.mxu0 %v345
    %403 = vmatpush2.bf16.msra.mxu0 %v344
    %404 = vmatprep.subr.bf16.mxu0 %v343
    %405 = vmatpush2.bf16.msra.mxu0 %v342
    %406 = vmatprep.subr.bf16.mxu0 %v341
    %407 = vmatpush2.bf16.msra.mxu0 %v340
    %408 = vmatprep.subr.bf16.mxu0 %v339
    %409 = vmatpush2.bf16.msra.mxu0 %v338
    %410 = vmatprep.subr.bf16.mxu0 %v337
    %411 = vmatpush2.bf16.msra.mxu0 %v336
    %412 = vmatprep.subr.bf16.mxu0 %v335
    %413 = vmatpush2.bf16.msra.mxu0 %v334
    %414 = vmatprep.mubr.bf16.mxu0 %v177
    %415 = vmatmul.mubr.bf16.gmra.mxu0 %v176
    %v416 = vpop.f32.mrf.mxu0
    %v417 = vadd.f32 %v215, %v416
    %v418 = vpop.f32.mrf.mxu0
    %v419 = vadd.f32 %v219, %v418
    %v420 = vpop.f32.mrf.mxu0
    %v421 = vpop.f32.mrf.mxu0
    %422 = vdwg.mxu0
    %vm423 = vcmp.gt.f32.partialorder %v417, 0.0
    %vm424 = vcmp.gt.f32.partialorder %v419, 0.0
    %v425 = vmul.f32 %v417, 0.01
    %v426 = vmul.f32 %v419, 0.01
    %v427 = vsel %vm423, %v417, %v425
    %v428 = vsel %vm424, %v419, %v426
    %v429 = vpack.c.bf16 %v427, %v427
    %v430 = vpack.c.bf16 %v428, %v428
    %v431 = vld [vmem:[#allocation8] sm:$0xff]
    %v432 = vld [vmem:[#allocation8 + $0x8] sm:$0xff]
    %v433 = vld [vmem:[#allocation8 + $0x10] sm:$0xff]
    %v434 = vld [vmem:[#allocation8 + $0x18] sm:$0xff]
    %v435 = vld [vmem:[#allocation8 + $0x20] sm:$0xff]
    %v436 = vld [vmem:[#allocation8 + $0x28] sm:$0xff]
    %v437 = vld [vmem:[#allocation8 + $0x30] sm:$0xff]
    %v438 = vld [vmem:[#allocation8 + $0x38] sm:$0xff]
    %v439 = vld [vmem:[#allocation8 + $0x40] sm:$0xff]
    %v440 = vld [vmem:[#allocation8 + $0x48] sm:$0xff]
    %v441 = vld [vmem:[#allocation8 + $0x50] sm:$0xff]
    %v442 = vld [vmem:[#allocation8 + $0x58] sm:$0xff]
    %v443 = vld [vmem:[#allocation8 + $0x60] sm:$0xff]
    %v444 = vld [vmem:[#allocation8 + $0x68] sm:$0xff]
    %v445 = vld [vmem:[#allocation8 + $0x70] sm:$0xff]
    %v446 = vld [vmem:[#allocation8 + $0x78] sm:$0xff]
    %v447 = vld [vmem:[#allocation8 + $0x80] sm:$0xff]
    %v448 = vld [vmem:[#allocation8 + $0x88] sm:$0xff]
    %v449 = vld [vmem:[#allocation8 + $0x90] sm:$0xff]
    %v450 = vld [vmem:[#allocation8 + $0x98] sm:$0xff]
    %v451 = vld [vmem:[#allocation8 + $0xa0] sm:$0xff]
    %v452 = vld [vmem:[#allocation8 + $0xa8] sm:$0xff]
    %v453 = vld [vmem:[#allocation8 + $0xb0] sm:$0xff]
    %v454 = vld [vmem:[#allocation8 + $0xb8] sm:$0xff]
    %v455 = vld [vmem:[#allocation8 + $0xc0] sm:$0xff]
    %v456 = vld [vmem:[#allocation8 + $0xc8] sm:$0xff]
    %v457 = vld [vmem:[#allocation8 + $0xd0] sm:$0xff]
    %v458 = vld [vmem:[#allocation8 + $0xd8] sm:$0xff]
    %v459 = vld [vmem:[#allocation8 + $0xe0] sm:$0xff]
    %v460 = vld [vmem:[#allocation8 + $0xe8] sm:$0xff]
    %v461 = vld [vmem:[#allocation8 + $0xf0] sm:$0xff]
    %v462 = vld [vmem:[#allocation8 + $0xf8] sm:$0xff]
    %v463 = vld [vmem:[%s6] sm:$0x3]
    %v465 = vlaneseq
    %v466 = vshrl.u32 %v465, 7
    %v467 = vsub.s32 0, %v466
    %v468 = vrot.slane %v463, %v467
    %v469 = vlaneseq
    %v470 = vshrl.u32 %v469, 7
    %v471 = vsub.s32 1, %v470
    %v472 = vrot.slane %v463, %v471
    %v507 = vunpack.c.l.b16 %v431
    %v508 = vunpack.c.h.b16 %v431
    %v509 = vunpack.c.l.b16 %v432
    %v510 = vunpack.c.h.b16 %v432
    %v511 = vunpack.c.l.b16 %v433
    %v512 = vunpack.c.h.b16 %v433
    %v513 = vunpack.c.l.b16 %v434
    %v514 = vunpack.c.h.b16 %v434
    %v515 = vunpack.c.l.b16 %v435
    %v516 = vunpack.c.h.b16 %v435
    %v517 = vunpack.c.l.b16 %v436
    %v518 = vunpack.c.h.b16 %v436
    %v519 = vunpack.c.l.b16 %v437
    %v520 = vunpack.c.h.b16 %v437
    %v521 = vunpack.c.l.b16 %v438
    %v522 = vunpack.c.h.b16 %v438
    %v523 = vunpack.c.l.b16 %v439
    %v524 = vunpack.c.h.b16 %v439
    %v525 = vunpack.c.l.b16 %v440
    %v526 = vunpack.c.h.b16 %v440
    %v527 = vunpack.c.l.b16 %v441
    %v528 = vunpack.c.h.b16 %v441
    %v529 = vunpack.c.l.b16 %v442
    %v530 = vunpack.c.h.b16 %v442
    %v531 = vunpack.c.l.b16 %v443
    %v532 = vunpack.c.h.b16 %v443
    %v533 = vunpack.c.l.b16 %v444
    %v534 = vunpack.c.h.b16 %v444
    %v535 = vunpack.c.l.b16 %v445
    %v536 = vunpack.c.h.b16 %v445
    %v537 = vunpack.c.l.b16 %v446
    %v538 = vunpack.c.h.b16 %v446
    %v539 = vunpack.c.l.b16 %v447
    %v540 = vunpack.c.h.b16 %v447
    %v541 = vunpack.c.l.b16 %v448
    %v542 = vunpack.c.h.b16 %v448
    %v543 = vunpack.c.l.b16 %v449
    %v544 = vunpack.c.h.b16 %v449
    %v545 = vunpack.c.l.b16 %v450
    %v546 = vunpack.c.h.b16 %v450
    %v547 = vunpack.c.l.b16 %v451
    %v548 = vunpack.c.h.b16 %v451
    %v549 = vunpack.c.l.b16 %v452
    %v550 = vunpack.c.h.b16 %v452
    %v551 = vunpack.c.l.b16 %v453
    %v552 = vunpack.c.h.b16 %v453
    %v553 = vunpack.c.l.b16 %v454
    %v554 = vunpack.c.h.b16 %v454
    %v555 = vunpack.c.l.b16 %v455
    %v556 = vunpack.c.h.b16 %v455
    %v557 = vunpack.c.l.b16 %v456
    %v558 = vunpack.c.h.b16 %v456
    %v559 = vunpack.c.l.b16 %v457
    %v560 = vunpack.c.h.b16 %v457
    %v561 = vunpack.c.l.b16 %v458
    %v562 = vunpack.c.h.b16 %v458
    %v563 = vunpack.c.l.b16 %v459
    %v564 = vunpack.c.h.b16 %v459
    %v565 = vunpack.c.l.b16 %v460
    %v566 = vunpack.c.h.b16 %v460
    %v567 = vunpack.c.l.b16 %v461
    %v568 = vunpack.c.h.b16 %v461
    %v569 = vunpack.c.l.b16 %v462
    %v570 = vunpack.c.h.b16 %v462
    %v571 = vpack.c.b16 %v509, %v507
    %v572 = vpack.c.b16 %v510, %v508
    %v573 = vpack.c.b16 %v513, %v511
    %v574 = vpack.c.b16 %v514, %v512
    %v575 = vpack.c.b16 %v517, %v515
    %v576 = vpack.c.b16 %v518, %v516
    %v577 = vpack.c.b16 %v521, %v519
    %v578 = vpack.c.b16 %v522, %v520
    %v579 = vpack.c.b16 %v525, %v523
    %v580 = vpack.c.b16 %v526, %v524
    %v581 = vpack.c.b16 %v529, %v527
    %v582 = vpack.c.b16 %v530, %v528
    %v583 = vpack.c.b16 %v533, %v531
    %v584 = vpack.c.b16 %v534, %v532
    %v585 = vpack.c.b16 %v537, %v535
    %v586 = vpack.c.b16 %v538, %v536
    %v587 = vpack.c.b16 %v541, %v539
    %v588 = vpack.c.b16 %v542, %v540
    %v589 = vpack.c.b16 %v545, %v543
    %v590 = vpack.c.b16 %v546, %v544
    %v591 = vpack.c.b16 %v549, %v547
    %v592 = vpack.c.b16 %v550, %v548
    %v593 = vpack.c.b16 %v553, %v551
    %v594 = vpack.c.b16 %v554, %v552
    %v595 = vpack.c.b16 %v557, %v555
    %v596 = vpack.c.b16 %v558, %v556
    %v597 = vpack.c.b16 %v561, %v559
    %v598 = vpack.c.b16 %v562, %v560
    %v599 = vpack.c.b16 %v565, %v563
    %v600 = vpack.c.b16 %v566, %v564
    %v601 = vpack.c.b16 %v569, %v567
    %v602 = vpack.c.b16 %v570, %v568
    %635 = vmatprep.subr.bf16.mxu0 %v586
    %636 = vmatpush1.bf16.msra.mxu0 %v585
    %637 = vmatprep.subr.bf16.mxu0 %v584
    %638 = vmatpush1.bf16.msra.mxu0 %v583
    %639 = vmatprep.subr.bf16.mxu0 %v582
    %640 = vmatpush1.bf16.msra.mxu0 %v581
    %641 = vmatprep.subr.bf16.mxu0 %v580
    %642 = vmatpush1.bf16.msra.mxu0 %v579
    %643 = vmatprep.subr.bf16.mxu0 %v578
    %644 = vmatpush1.bf16.msra.mxu0 %v577
    %645 = vmatprep.subr.bf16.mxu0 %v576
    %646 = vmatpush1.bf16.msra.mxu0 %v575
    %647 = vmatprep.subr.bf16.mxu0 %v574
    %648 = vmatpush1.bf16.msra.mxu0 %v573
    %649 = vmatprep.subr.bf16.mxu0 %v572
    %650 = vmatpush1.bf16.msra.mxu0 %v571
    %651 = vmatprep.subr.bf16.mxu0 %v602
    %652 = vmatpush2.bf16.msra.mxu0 %v601
    %653 = vmatprep.subr.bf16.mxu0 %v600
    %654 = vmatpush2.bf16.msra.mxu0 %v599
    %655 = vmatprep.subr.bf16.mxu0 %v598
    %656 = vmatpush2.bf16.msra.mxu0 %v597
    %657 = vmatprep.subr.bf16.mxu0 %v596
    %658 = vmatpush2.bf16.msra.mxu0 %v595
    %659 = vmatprep.subr.bf16.mxu0 %v594
    %660 = vmatpush2.bf16.msra.mxu0 %v593
    %661 = vmatprep.subr.bf16.mxu0 %v592
    %662 = vmatpush2.bf16.msra.mxu0 %v591
    %663 = vmatprep.subr.bf16.mxu0 %v590
    %664 = vmatpush2.bf16.msra.mxu0 %v589
    %665 = vmatprep.subr.bf16.mxu0 %v588
    %666 = vmatpush2.bf16.msra.mxu0 %v587
    %667 = vmatprep.mubr.bf16.mxu0 %v430
    %668 = vmatmul.mubr.bf16.gmra.mxu0 %v429
    %v669 = vpop.f32.mrf.mxu0
    %v670 = vadd.f32 %v468, %v669
    %v671 = vpop.f32.mrf.mxu0
    %v672 = vadd.f32 %v472, %v671
    %v673 = vpop.f32.mrf.mxu0
    %v674 = vpop.f32.mrf.mxu0
    %675 = vdwg.mxu0
    %vm676 = vcmp.gt.f32.partialorder %v670, 0.0
    %vm677 = vcmp.gt.f32.partialorder %v672, 0.0
    %v678 = vmul.f32 %v670, 0.01
    %v679 = vmul.f32 %v672, 0.01
    %v680 = vsel %vm676, %v670, %v678
    %v681 = vsel %vm677, %v672, %v679
    %v682 = vpack.c.bf16 %v680, %v680
    %v683 = vpack.c.bf16 %v681, %v681
    %v684 = vld [vmem:[#allocation10] sm:$0xf]
    %v685 = vld [vmem:[#allocation10 + $0x4] sm:$0xf]
    %v686 = vld [vmem:[#allocation10 + $0x8] sm:$0xf]
    %v687 = vld [vmem:[#allocation10 + $0xc] sm:$0xf]
    %v688 = vld [vmem:[#allocation10 + $0x10] sm:$0xf]
    %v689 = vld [vmem:[#allocation10 + $0x14] sm:$0xf]
    %v690 = vld [vmem:[#allocation10 + $0x18] sm:$0xf]
    %v691 = vld [vmem:[#allocation10 + $0x1c] sm:$0xf]
    %v692 = vld [vmem:[#allocation10 + $0x20] sm:$0xf]
    %v693 = vld [vmem:[#allocation10 + $0x24] sm:$0xf]
    %v694 = vld [vmem:[#allocation10 + $0x28] sm:$0xf]
    %v695 = vld [vmem:[#allocation10 + $0x2c] sm:$0xf]
    %v696 = vld [vmem:[#allocation10 + $0x30] sm:$0xf]
    %v697 = vld [vmem:[#allocation10 + $0x34] sm:$0xf]
    %v698 = vld [vmem:[#allocation10 + $0x38] sm:$0xf]
    %v699 = vld [vmem:[#allocation10 + $0x3c] sm:$0xf]
    %v700 = vld [vmem:[#allocation10 + $0x40] sm:$0xf]
    %v701 = vld [vmem:[#allocation10 + $0x44] sm:$0xf]
    %v702 = vld [vmem:[#allocation10 + $0x48] sm:$0xf]
    %v703 = vld [vmem:[#allocation10 + $0x4c] sm:$0xf]
    %v704 = vld [vmem:[#allocation10 + $0x50] sm:$0xf]
    %v705 = vld [vmem:[#allocation10 + $0x54] sm:$0xf]
    %v706 = vld [vmem:[#allocation10 + $0x58] sm:$0xf]
    %v707 = vld [vmem:[#allocation10 + $0x5c] sm:$0xf]
    %v708 = vld [vmem:[#allocation10 + $0x60] sm:$0xf]
    %v709 = vld [vmem:[#allocation10 + $0x64] sm:$0xf]
    %v710 = vld [vmem:[#allocation10 + $0x68] sm:$0xf]
    %v711 = vld [vmem:[#allocation10 + $0x6c] sm:$0xf]
    %v712 = vld [vmem:[#allocation10 + $0x70] sm:$0xf]
    %v713 = vld [vmem:[#allocation10 + $0x74] sm:$0xf]
    %v714 = vld [vmem:[#allocation10 + $0x78] sm:$0xf]
    %v715 = vld [vmem:[#allocation10 + $0x7c] sm:$0xf]
    %v716 = vld [vmem:[%s8] sm:$0x1]
    %v718 = vlaneseq
    %v719 = vshrl.u32 %v718, 7
    %v720 = vsub.s32 0, %v719
    %v721 = vrot.slane %v716, %v720
    %v755 = vunpack.c.l.b16 %v684
    %v756 = vunpack.c.l.b16 %v685
    %v757 = vunpack.c.l.b16 %v686
    %v758 = vunpack.c.l.b16 %v687
    %v759 = vunpack.c.l.b16 %v688
    %v760 = vunpack.c.l.b16 %v689
    %v761 = vunpack.c.l.b16 %v690
    %v762 = vunpack.c.l.b16 %v691
    %v763 = vunpack.c.l.b16 %v692
    %v764 = vunpack.c.l.b16 %v693
    %v765 = vunpack.c.l.b16 %v694
    %v766 = vunpack.c.l.b16 %v695
    %v767 = vunpack.c.l.b16 %v696
    %v768 = vunpack.c.l.b16 %v697
    %v769 = vunpack.c.l.b16 %v698
    %v770 = vunpack.c.l.b16 %v699
    %v771 = vunpack.c.l.b16 %v700
    %v772 = vunpack.c.l.b16 %v701
    %v773 = vunpack.c.l.b16 %v702
    %v774 = vunpack.c.l.b16 %v703
    %v775 = vunpack.c.l.b16 %v704
    %v776 = vunpack.c.l.b16 %v705
    %v777 = vunpack.c.l.b16 %v706
    %v778 = vunpack.c.l.b16 %v707
    %v779 = vunpack.c.l.b16 %v708
    %v780 = vunpack.c.l.b16 %v709
    %v781 = vunpack.c.l.b16 %v710
    %v782 = vunpack.c.l.b16 %v711
    %v783 = vunpack.c.l.b16 %v712
    %v784 = vunpack.c.l.b16 %v713
    %v785 = vunpack.c.l.b16 %v714
    %v786 = vunpack.c.l.b16 %v715
    %v787 = vpack.c.b16 %v756, %v755
    %v788 = vpack.c.b16 %v758, %v757
    %v789 = vpack.c.b16 %v760, %v759
    %v790 = vpack.c.b16 %v762, %v761
    %v791 = vpack.c.b16 %v764, %v763
    %v792 = vpack.c.b16 %v766, %v765
    %v793 = vpack.c.b16 %v768, %v767
    %v794 = vpack.c.b16 %v770, %v769
    %v795 = vpack.c.b16 %v772, %v771
    %v796 = vpack.c.b16 %v774, %v773
    %v797 = vpack.c.b16 %v776, %v775
    %v798 = vpack.c.b16 %v778, %v777
    %v799 = vpack.c.b16 %v780, %v779
    %v800 = vpack.c.b16 %v782, %v781
    %v801 = vpack.c.b16 %v784, %v783
    %v802 = vpack.c.b16 %v786, %v785
    %819 = vmatprep.subr.bf16.mxu0 0
    %820 = vmatpush1.bf16.msra.mxu0 %v794
    %821 = vmatprep.subr.bf16.mxu0 0
    %822 = vmatpush1.bf16.msra.mxu0 %v793
    %823 = vmatprep.subr.bf16.mxu0 0
    %824 = vmatpush1.bf16.msra.mxu0 %v792
    %825 = vmatprep.subr.bf16.mxu0 0
    %826 = vmatpush1.bf16.msra.mxu0 %v791
    %827 = vmatprep.subr.bf16.mxu0 0
    %828 = vmatpush1.bf16.msra.mxu0 %v790
    %829 = vmatprep.subr.bf16.mxu0 0
    %830 = vmatpush1.bf16.msra.mxu0 %v789
    %831 = vmatprep.subr.bf16.mxu0 0
    %832 = vmatpush1.bf16.msra.mxu0 %v788
    %833 = vmatprep.subr.bf16.mxu0 0
    %834 = vmatpush1.bf16.msra.mxu0 %v787
    %835 = vmatprep.subr.bf16.mxu0 0
    %836 = vmatpush2.bf16.msra.mxu0 %v802
    %837 = vmatprep.subr.bf16.mxu0 0
    %838 = vmatpush2.bf16.msra.mxu0 %v801
    %839 = vmatprep.subr.bf16.mxu0 0
    %840 = vmatpush2.bf16.msra.mxu0 %v800
    %841 = vmatprep.subr.bf16.mxu0 0
    %842 = vmatpush2.bf16.msra.mxu0 %v799
    %843 = vmatprep.subr.bf16.mxu0 0
    %844 = vmatpush2.bf16.msra.mxu0 %v798
    %845 = vmatprep.subr.bf16.mxu0 0
    %846 = vmatpush2.bf16.msra.mxu0 %v797
    %847 = vmatprep.subr.bf16.mxu0 0
    %848 = vmatpush2.bf16.msra.mxu0 %v796
    %849 = vmatprep.subr.bf16.mxu0 0
    %850 = vmatpush2.bf16.msra.mxu0 %v795
    %851 = vmatprep.mubr.bf16.mxu0 %v683
    %852 = vmatmul.mubr.bf16.gmra.mxu0 %v682
    %v853 = vpop.f32.mrf.mxu0
    %v854 = vadd.f32 %v721, %v853
    %v855 = vpop.f32.mrf.mxu0
    %v856 = vpop.f32.mrf.mxu0
    %v857 = vpop.f32.mrf.mxu0
    %858 = vdwg.mxu0
    %859 = vmax.xlane.f32.xlu0 %v854
    %v860 = vpop.xlane.xlu0 %859
    %v861 = vsub.f32 %v854, %v860
    %v862 = vmul.f32 %v861, 1.442695
    %v863 = vpow.pop %v862
    %864 = vadd.xlane.f32.xlu0 %v863
    %v865 = vpop.xlane.xlu0 %864
    %v866 = vrcp.pop %v865
    %v867 = vmul.f32 %v863, %v866
    %v868 = vpack.c.bf16 %v867, %v867
    %869 = vst [vmem:[#allocation11] sm:$0xf] %v868
    // Predicated region
    $region58: #{tpu_custom_call.1} parent=1 // pred_check
      _
    $region59: #{tpu_custom_call.1} parent=1 // pred_check_branch
      %871 = sbr.rel (0) target = $region61
    $region60: #{tpu_custom_call.1} parent=1 // pred_region
      %s873 = ssub.s32 64, 64
      %874 = vsyncadd [#allocation4], %s873
      %s876 = sshll.u32 [#allocation11], 4
      %s877 = int_to_ptr.vmem [resolvable:$true] %s876
      %879 = dma.vmem_to_hbm [thread:$0]  %s877, 64, %s9, [#allocation4]
    $region61: #{tpu_custom_call.1} parent=1 // pred_fallthru
      _
    // Predicated region
    $region62: #{tpu_custom_call.1} parent=1 // pred_check
      _
    $region63: #{tpu_custom_call.1} parent=1 // pred_check_branch
      %881 = sbr.rel (0) target = $region65
    $region64: #{tpu_custom_call.1} parent=1 // pred_region
      %882 = dma.done [#allocation4], 64
    $region65: #{tpu_custom_call.1} parent=1 // pred_fallthru
      _
    %883 = vsyncpa [#allocation3], 1
    %884 = vsyncpa [#allocation6], 1
    %885 = vsyncpa [#allocation9], 1
    %886 = vsyncpa [#allocation4], 1

// kernel: tpu_custom_call.1
$region0: #{tpu_custom_call.1}
  #allocation0 [shape = 'u32[]', space=smem, size = 0x4, offset = 0x4, fixed_abs, tag = 'smem constant byte address 0x4 - core index']
  #allocation1 [shape = 'u32[144,128]{1,0:T(1,128)}', space=vmem, size = 0x12000, scoped, tag = 'internal scratch']
  %s0 = inlined_call_operand.hbm [shape: bf16[8,16], index: 0, kind: input, shape index: {}]
  %s1 = inlined_call_operand.hbm [shape: bf16[16,256], index: 1, kind: input, shape index: {}]
  %s2 = inlined_call_operand.vmem [shape: f32[1,256], index: 2, kind: input, shape index: {}]
  %s3 = inlined_call_operand.hbm [shape: bf16[256,256], index: 3, kind: input, shape index: {}]
  %s4 = inlined_call_operand.vmem [shape: f32[1,256], index: 4, kind: input, shape index: {}]
  %s5 = inlined_call_operand.hbm [shape: bf16[256,256], index: 5, kind: input, shape index: {}]
  %s6 = inlined_call_operand.vmem [shape: f32[1,256], index: 6, kind: input, shape index: {}]
  %s7 = inlined_call_operand.hbm [shape: bf16[256,128], index: 7, kind: input, shape index: {}]
  %s8 = inlined_call_operand.vmem [shape: f32[1,128], index: 8, kind: input, shape index: {}]
  %s9 = inlined_call_operand.hbm [shape: bf16[8,128], index: 9, kind: output, shape index: {}]
  %s10 = sld [smem:[#allocation0]]
  $region66: #{tpu_custom_call.1} parent=0
    _
  %s12 = ssub.s32 1, %s10
  %s13 = scalar_select 0, %s12, %s10
  $region1: #{tpu_custom_call.1} parent=0
    #allocation2 [shape = 'u8[2048]{0}', space=vmem, size = 0x800, scoped, tag = 'input window, operand 0, single buffered']
    #allocation3 [shape = 's32[1]{0}', space=sflag, size = 0x4, scoped, tag = 'scoped memory for tpu_custom_call.1']
    #allocation4 [shape = 's32[1]{0}', space=sflag, size = 0x4, scoped, tag = 'scoped memory for tpu_custom_call.1']
    #allocation5 [shape = 'u8[8192]{0}', space=vmem, size = 0x2000, scoped, tag = 'input window, operand 1, single buffered']
    #allocation6 [shape = 's32[1]{0}', space=sflag, size = 0x4, scoped, tag = 'scoped memory for tpu_custom_call.1']
    #allocation7 [shape = 'u8[131072]{0}', space=vmem, size = 0x20000, scoped, tag = 'input window, operand 3, single buffered']
    #allocation8 [shape = 'u8[131072]{0}', space=vmem, size = 0x20000, scoped, tag = 'input window, operand 5, single buffered']
    #allocation9 [shape = 's32[1]{0}', space=sflag, size = 0x4, scoped, tag = 'scoped memory for tpu_custom_call.1']
    #allocation10 [shape = 'u8[65536]{0}', space=vmem, size = 0x10000, scoped, tag = 'input window, operand 7, single buffered']
    #allocation11 [shape = 'u8[2048]{0}', space=vmem, size = 0x800, scoped, tag = 'output window, operand 0, single buffered']
    %14 = vsyncpa [#allocation3], 0
    %15 = vsyncpa [#allocation6], 0
    %16 = vsyncpa [#allocation9], 0
    %17 = vsyncpa [#allocation4], 0
    // Predicated region
    $region2: #{tpu_custom_call.1} parent=1 // pred_check
      _
    $region3: #{tpu_custom_call.1} parent=1 // pred_check_branch
      %19 = sbr.rel (0) target = $region5
    $region4: #{tpu_custom_call.1} parent=1 // pred_region
      %s21 = ssub.s32 64, 64
      %22 = vsyncadd [#allocation3], %s21
      %s24 = sshll.u32 [#allocation2], 4
      %s25 = int_to_ptr.vmem [resolvable:$true] %s24
      %27 = dma.hbm_to_vmem [thread:$0]  %s0, 64, %s25, [#allocation3]
    $region5: #{tpu_custom_call.1} parent=1 // pred_fallthru
      _
    // Predicated region
    $region6: #{tpu_custom_call.1} parent=1 // pred_check
      _
    $region7: #{tpu_custom_call.1} parent=1 // pred_check_branch
      %29 = sbr.rel (0) target = $region9
    $region8: #{tpu_custom_call.1} parent=1 // pred_region
      %s31 = ssub.s32 256, 256
      %32 = vsyncadd [#allocation6], %s31
      %s33 = sshll.u32 [#allocation5], 4
      %s34 = int_to_ptr.vmem [resolvable:$true] %s33
      %39 = dma.hbm_to_vmem [thread:$0]  %s1, 256, %s34, [#allocation6], 128, 128, 8
    $region9: #{tpu_custom_call.1} parent=1 // pred_fallthru
      _
    // Predicated region
    $region10: #{tpu_custom_call.1} parent=1 // pred_check
      _
    $region11: #{tpu_custom_call.1} parent=1 // pred_check_branch
      %41 = sbr.rel (0) target = $region13
    $region12: #{tpu_custom_call.1} parent=1 // pred_region
      _
    $region13: #{tpu_custom_call.1} parent=1 // pred_fallthru
      _
    // Predicated region
    $region14: #{tpu_custom_call.1} parent=1 // pred_check
      _
    $region15: #{tpu_custom_call.1} parent=1 // pred_check_branch
      %43 = sbr.rel (0) target = $region17
    $region16: #{tpu_custom_call.1} parent=1 // pred_region
      %s45 = ssub.s32 4096, 4096
      %46 = vsyncadd [#allocation6], %s45
      %s47 = sshll.u32 [#allocation7], 4
      %s48 = int_to_ptr.vmem [resolvable:$true] %s47
      %53 = dma.hbm_to_vmem [thread:$0]  %s3, 4096, %s48, [#allocation6], 128, 128, 8
    $region17: #{tpu_custom_call.1} parent=1 // pred_fallthru
      _
    // Predicated region
    $region18: #{tpu_custom_call.1} parent=1 // pred_check
      _
    $region19: #{tpu_custom_call.1} parent=1 // pred_check_branch
      %55 = sbr.rel (0) target = $region21
    $region20: #{tpu_custom_call.1} parent=1 // pred_region
      _
    $region21: #{tpu_custom_call.1} parent=1 // pred_fallthru
      _
    // Predicated region
    $region22: #{tpu_custom_call.1} parent=1 // pred_check
      _
    $region23: #{tpu_custom_call.1} parent=1 // pred_check_branch
      %57 = sbr.rel (0) target = $region25
    $region24: #{tpu_custom_call.1} parent=1 // pred_region
      %s59 = ssub.s32 4096, 4096
      %60 = vsyncadd [#allocation9], %s59
      %s61 = sshll.u32 [#allocation8], 4
      %s62 = int_to_ptr.vmem [resolvable:$true] %s61
      %67 = dma.hbm_to_vmem [thread:$0]  %s5, 4096, %s62, [#allocation9], 128, 128, 8
    $region25: #{tpu_custom_call.1} parent=1 // pred_fallthru
      _
    // Predicated region
    $region26: #{tpu_custom_call.1} parent=1 // pred_check
      _
    $region27: #{tpu_custom_call.1} parent=1 // pred_check_branch
      %69 = sbr.rel (0) target = $region29
    $region28: #{tpu_custom_call.1} parent=1 // pred_region
      _
    $region29: #{tpu_custom_call.1} parent=1 // pred_fallthru
      _
    // Predicated region
    $region30: #{tpu_custom_call.1} parent=1 // pred_check
      _
    $region31: #{tpu_custom_call.1} parent=1 // pred_check_branch
      %71 = sbr.rel (0) target = $region33
    $region32: #{tpu_custom_call.1} parent=1 // pred_region
      %s73 = ssub.s32 2048, 2048
      %74 = vsyncadd [#allocation9], %s73
      %s75 = sshll.u32 [#allocation10], 4
      %s76 = int_to_ptr.vmem [resolvable:$true] %s75
      %81 = dma.hbm_to_vmem [thread:$0]  %s7, 2048, %s76, [#allocation9], 64, 64, 4
    $region33: #{tpu_custom_call.1} parent=1 // pred_fallthru
      _
    // Predicated region
    $region34: #{tpu_custom_call.1} parent=1 // pred_check
      _
    $region35: #{tpu_custom_call.1} parent=1 // pred_check_branch
      %83 = sbr.rel (0) target = $region37
    $region36: #{tpu_custom_call.1} parent=1 // pred_region
      _
    $region37: #{tpu_custom_call.1} parent=1 // pred_fallthru
      _
    // Predicated region
    $region38: #{tpu_custom_call.1} parent=1 // pred_check
      _
    $region39: #{tpu_custom_call.1} parent=1 // pred_check_branch
      %85 = sbr.rel (0) target = $region41
    $region40: #{tpu_custom_call.1} parent=1 // pred_region
      %86 = dma.done [#allocation3], 64
    $region41: #{tpu_custom_call.1} parent=1 // pred_fallthru
      _
    // Predicated region
    $region42: #{tpu_custom_call.1} parent=1 // pred_check
      _
    $region43: #{tpu_custom_call.1} parent=1 // pred_check_branch
      %88 = sbr.rel (0) target = $region45
    $region44: #{tpu_custom_call.1} parent=1 // pred_region
      %89 = dma.done [#allocation6], 256
    $region45: #{tpu_custom_call.1} parent=1 // pred_fallthru
      _
    // Predicated region
    $region46: #{tpu_custom_call.1} parent=1 // pred_check
      _
    $region47: #{tpu_custom_call.1} parent=1 // pred_check_branch
      %91 = sbr.rel (0) target = $region49
    $region48: #{tpu_custom_call.1} parent=1 // pred_region
      %92 = dma.done [#allocation6], 4096
    $region49: #{tpu_custom_call.1} parent=1 // pred_fallthru
      _
    // Predicated region
    $region50: #{tpu_custom_call.1} parent=1 // pred_check
      _
    $region51: #{tpu_custom_call.1} parent=1 // pred_check_branch
      %94 = sbr.rel (0) target = $region53
    $region52: #{tpu_custom_call.1} parent=1 // pred_region
      %95 = dma.done [#allocation9], 4096
    $region53: #{tpu_custom_call.1} parent=1 // pred_fallthru
      _
    // Predicated region
    $region54: #{tpu_custom_call.1} parent=1 // pred_check
      _
    $region55: #{tpu_custom_call.1} parent=1 // pred_check_branch
      %97 = sbr.rel (0) target = $region57
    $region56: #{tpu_custom_call.1} parent=1 // pred_region
      %98 = dma.done [#allocation9], 2048
    $region57: #{tpu_custom_call.1} parent=1 // pred_fallthru
      _
    %v100 = vld [vmem:[#allocation2] sm:$0xf]
    %v101 = vld [vmem:[#allocation5] sm:$0xff]
    %v102 = vld [vmem:[#allocation5 + $0x8] sm:$0xff]
    %v103 = vld [vmem:[%s2] sm:$0x3]
    %v105 = vlaneseq
    %v106 = vshrl.u32 %v105, 7
    %v107 = vsub.s32 0, %v106
    %v108 = vrot.slane %v103, %v107
    %v109 = vlaneseq
    %v110 = vshrl.u32 %v109, 7
    %v111 = vsub.s32 1, %v110
    %v112 = vrot.slane %v103, %v111
    %v117 = vunpack.c.l.b16 %v101
    %v118 = vunpack.c.h.b16 %v101
    %v119 = vunpack.c.l.b16 %v102
    %v120 = vunpack.c.h.b16 %v102
    %v121 = vpack.c.b16 %v119, %v117
    %v122 = vpack.c.b16 %v120, %v118
    %vm125 = vcmask 130048
    %v127 = vsel %vm125, %v100, 0
    %129 = vmatprep.subr.bf16.mxu0 0
    %130 = vmatpush1.bf16.msra.mxu0 0
    %131 = vmatprep.subr.bf16.mxu0 0
    %132 = vmatpush1.bf16.msra.mxu0 0
    %133 = vmatprep.subr.bf16.mxu0 0
    %134 = vmatpush1.bf16.msra.mxu0 0
    %135 = vmatprep.subr.bf16.mxu0 0
    %136 = vmatpush1.bf16.msra.mxu0 0
    %137 = vmatprep.subr.bf16.mxu0 0
    %138 = vmatpush1.bf16.msra.mxu0 0
    %139 = vmatprep.subr.bf16.mxu0 0
    %140 = vmatpush1.bf16.msra.mxu0 0
    %141 = vmatprep.subr.bf16.mxu0 0
    %142 = vmatpush1.bf16.msra.mxu0 0
    %143 = vmatprep.subr.bf16.mxu0 %v122
    %144 = vmatpush1.bf16.msra.mxu0 %v121
    %145 = vmatprep.subr.bf16.mxu0 0
    %146 = vmatpush2.bf16.msra.mxu0 0
    %147 = vmatprep.subr.bf16.mxu0 0
    %148 = vmatpush2.bf16.msra.mxu0 0
    %149 = vmatprep.subr.bf16.mxu0 0
    %150 = vmatpush2.bf16.msra.mxu0 0
    %151 = vmatprep.subr.bf16.mxu0 0
    %152 = vmatpush2.bf16.msra.mxu0 0
    %153 = vmatprep.subr.bf16.mxu0 0
    %154 = vmatpush2.bf16.msra.mxu0 0
    %155 = vmatprep.subr.bf16.mxu0 0
    %156 = vmatpush2.bf16.msra.mxu0 0
    %157 = vmatprep.subr.bf16.mxu0 0
    %158 = vmatpush2.bf16.msra.mxu0 0
    %159 = vmatprep.subr.bf16.mxu0 0
    %160 = vmatpush2.bf16.msra.mxu0 0
    %161 = vmatprep.mubr.bf16.mxu0 0
    %162 = vmatmul.mubr.bf16.gmra.mxu0 %v127
    %v163 = vpop.f32.mrf.mxu0
    %v164 = vadd.f32 %v108, %v163
    %v165 = vpop.f32.mrf.mxu0
    %v166 = vadd.f32 %v112, %v165
    %v167 = vpop.f32.mrf.mxu0
    %v168 = vpop.f32.mrf.mxu0
    %169 = vdwg.mxu0
    %vm170 = vcmp.gt.f32.partialorder %v164, 0.0
    %vm171 = vcmp.gt.f32.partialorder %v166, 0.0
    %v172 = vmul.f32 %v164, 0.01
    %v173 = vmul.f32 %v166, 0.01
    %v174 = vsel %vm170, %v164, %v172
    %v175 = vsel %vm171, %v166, %v173
    %v176 = vpack.c.bf16 %v174, %v174
    %v177 = vpack.c.bf16 %v175, %v175
    %v178 = vld [vmem:[#allocation7] sm:$0xff]
    %v179 = vld [vmem:[#allocation7 + $0x8] sm:$0xff]
    %v180 = vld [vmem:[#allocation7 + $0x10] sm:$0xff]
    %v181 = vld [vmem:[#allocation7 + $0x18] sm:$0xff]
    %v182 = vld [vmem:[#allocation7 + $0x20] sm:$0xff]
    %v183 = vld [vmem:[#allocation7 + $0x28] sm:$0xff]
    %v184 = vld [vmem:[#allocation7 + $0x30] sm:$0xff]
    %v185 = vld [vmem:[#allocation7 + $0x38] sm:$0xff]
    %v186 = vld [vmem:[#allocation7 + $0x40] sm:$0xff]
    %v187 = vld [vmem:[#allocation7 + $0x48] sm:$0xff]
    %v188 = vld [vmem:[#allocation7 + $0x50] sm:$0xff]
    %v189 = vld [vmem:[#allocation7 + $0x58] sm:$0xff]
    %v190 = vld [vmem:[#allocation7 + $0x60] sm:$0xff]
    %v191 = vld [vmem:[#allocation7 + $0x68] sm:$0xff]
    %v192 = vld [vmem:[#allocation7 + $0x70] sm:$0xff]
    %v193 = vld [vmem:[#allocation7 + $0x78] sm:$0xff]
    %v194 = vld [vmem:[#allocation7 + $0x80] sm:$0xff]
    %v195 = vld [vmem:[#allocation7 + $0x88] sm:$0xff]
    %v196 = vld [vmem:[#allocation7 + $0x90] sm:$0xff]
    %v197 = vld [vmem:[#allocation7 + $0x98] sm:$0xff]
    %v198 = vld [vmem:[#allocation7 + $0xa0] sm:$0xff]
    %v199 = vld [vmem:[#allocation7 + $0xa8] sm:$0xff]
    %v200 = vld [vmem:[#allocation7 + $0xb0] sm:$0xff]
    %v201 = vld [vmem:[#allocation7 + $0xb8] sm:$0xff]
    %v202 = vld [vmem:[#allocation7 + $0xc0] sm:$0xff]
    %v203 = vld [vmem:[#allocation7 + $0xc8] sm:$0xff]
    %v204 = vld [vmem:[#allocation7 + $0xd0] sm:$0xff]
    %v205 = vld [vmem:[#allocation7 + $0xd8] sm:$0xff]
    %v206 = vld [vmem:[#allocation7 + $0xe0] sm:$0xff]
    %v207 = vld [vmem:[#allocation7 + $0xe8] sm:$0xff]
    %v208 = vld [vmem:[#allocation7 + $0xf0] sm:$0xff]
    %v209 = vld [vmem:[#allocation7 + $0xf8] sm:$0xff]
    %v210 = vld [vmem:[%s4] sm:$0x3]
    %v212 = vlaneseq
    %v213 = vshrl.u32 %v212, 7
    %v214 = vsub.s32 0, %v213
    %v215 = vrot.slane %v210, %v214
    %v216 = vlaneseq
    %v217 = vshrl.u32 %v216, 7
    %v218 = vsub.s32 1, %v217
    %v219 = vrot.slane %v210, %v218
    %v254 = vunpack.c.l.b16 %v178
    %v255 = vunpack.c.h.b16 %v178
    %v256 = vunpack.c.l.b16 %v179
    %v257 = vunpack.c.h.b16 %v179
    %v258 = vunpack.c.l.b16 %v180
    %v259 = vunpack.c.h.b16 %v180
    %v260 = vunpack.c.l.b16 %v181
    %v261 = vunpack.c.h.b16 %v181
    %v262 = vunpack.c.l.b16 %v182
    %v263 = vunpack.c.h.b16 %v182
    %v264 = vunpack.c.l.b16 %v183
    %v265 = vunpack.c.h.b16 %v183
    %v266 = vunpack.c.l.b16 %v184
    %v267 = vunpack.c.h.b16 %v184
    %v268 = vunpack.c.l.b16 %v185
    %v269 = vunpack.c.h.b16 %v185
    %v270 = vunpack.c.l.b16 %v186
    %v271 = vunpack.c.h.b16 %v186
    %v272 = vunpack.c.l.b16 %v187
    %v273 = vunpack.c.h.b16 %v187
    %v274 = vunpack.c.l.b16 %v188
    %v275 = vunpack.c.h.b16 %v188
    %v276 = vunpack.c.l.b16 %v189
    %v277 = vunpack.c.h.b16 %v189
    %v278 = vunpack.c.l.b16 %v190
    %v279 = vunpack.c.h.b16 %v190
    %v280 = vunpack.c.l.b16 %v191
    %v281 = vunpack.c.h.b16 %v191
    %v282 = vunpack.c.l.b16 %v192
    %v283 = vunpack.c.h.b16 %v192
    %v284 = vunpack.c.l.b16 %v193
    %v285 = vunpack.c.h.b16 %v193
    %v286 = vunpack.c.l.b16 %v194
    %v287 = vunpack.c.h.b16 %v194
    %v288 = vunpack.c.l.b16 %v195
    %v289 = vunpack.c.h.b16 %v195
    %v290 = vunpack.c.l.b16 %v196
    %v291 = vunpack.c.h.b16 %v196
    %v292 = vunpack.c.l.b16 %v197
    %v293 = vunpack.c.h.b16 %v197
    %v294 = vunpack.c.l.b16 %v198
    %v295 = vunpack.c.h.b16 %v198
    %v296 = vunpack.c.l.b16 %v199
    %v297 = vunpack.c.h.b16 %v199
    %v298 = vunpack.c.l.b16 %v200
    %v299 = vunpack.c.h.b16 %v200
    %v300 = vunpack.c.l.b16 %v201
    %v301 = vunpack.c.h.b16 %v201
    %v302 = vunpack.c.l.b16 %v202
    %v303 = vunpack.c.h.b16 %v202
    %v304 = vunpack.c.l.b16 %v203
    %v305 = vunpack.c.h.b16 %v203
    %v306 = vunpack.c.l.b16 %v204
    %v307 = vunpack.c.h.b16 %v204
    %v308 = vunpack.c.l.b16 %v205
    %v309 = vunpack.c.h.b16 %v205
    %v310 = vunpack.c.l.b16 %v206
    %v311 = vunpack.c.h.b16 %v206
    %v312 = vunpack.c.l.b16 %v207
    %v313 = vunpack.c.h.b16 %v207
    %v314 = vunpack.c.l.b16 %v208
    %v315 = vunpack.c.h.b16 %v208
    %v316 = vunpack.c.l.b16 %v209
    %v317 = vunpack.c.h.b16 %v209
    %v318 = vpack.c.b16 %v256, %v254
    %v319 = vpack.c.b16 %v257, %v255
    %v320 = vpack.c.b16 %v260, %v258
    %v321 = vpack.c.b16 %v261, %v259
    %v322 = vpack.c.b16 %v264, %v262
    %v323 = vpack.c.b16 %v265, %v263
    %v324 = vpack.c.b16 %v268, %v266
    %v325 = vpack.c.b16 %v269, %v267
    %v326 = vpack.c.b16 %v272, %v270
    %v327 = vpack.c.b16 %v273, %v271
    %v328 = vpack.c.b16 %v276, %v274
    %v329 = vpack.c.b16 %v277, %v275
    %v330 = vpack.c.b16 %v280, %v278
    %v331 = vpack.c.b16 %v281, %v279
    %v332 = vpack.c.b16 %v284, %v282
    %v333 = vpack.c.b16 %v285, %v283
    %v334 = vpack.c.b16 %v288, %v286
    %v335 = vpack.c.b16 %v289, %v287
    %v336 = vpack.c.b16 %v292, %v290
    %v337 = vpack.c.b16 %v293, %v291
    %v338 = vpack.c.b16 %v296, %v294
    %v339 = vpack.c.b16 %v297, %v295
    %v340 = vpack.c.b16 %v300, %v298
    %v341 = vpack.c.b16 %v301, %v299
    %v342 = vpack.c.b16 %v304, %v302
    %v343 = vpack.c.b16 %v305, %v303
    %v344 = vpack.c.b16 %v308, %v306
    %v345 = vpack.c.b16 %v309, %v307
    %v346 = vpack.c.b16 %v312, %v310
    %v347 = vpack.c.b16 %v313, %v311
    %v348 = vpack.c.b16 %v316, %v314
    %v349 = vpack.c.b16 %v317, %v315
    %382 = vmatprep.subr.bf16.mxu0 %v333
    %383 = vmatpush1.bf16.msra.mxu0 %v332
    %384 = vmatprep.subr.bf16.mxu0 %v331
    %385 = vmatpush1.bf16.msra.mxu0 %v330
    %386 = vmatprep.subr.bf16.mxu0 %v329
    %387 = vmatpush1.bf16.msra.mxu0 %v328
    %388 = vmatprep.subr.bf16.mxu0 %v327
    %389 = vmatpush1.bf16.msra.mxu0 %v326
    %390 = vmatprep.subr.bf16.mxu0 %v325
    %391 = vmatpush1.bf16.msra.mxu0 %v324
    %392 = vmatprep.subr.bf16.mxu0 %v323
    %393 = vmatpush1.bf16.msra.mxu0 %v322
    %394 = vmatprep.subr.bf16.mxu0 %v321
    %395 = vmatpush1.bf16.msra.mxu0 %v320
    %396 = vmatprep.subr.bf16.mxu0 %v319
    %397 = vmatpush1.bf16.msra.mxu0 %v318
    %398 = vmatprep.subr.bf16.mxu0 %v349
    %399 = vmatpush2.bf16.msra.mxu0 %v348
    %400 = vmatprep.subr.bf16.mxu0 %v347
    %401 = vmatpush2.bf16.msra.mxu0 %v346
    %402 = vmatprep.subr.bf16.mxu0 %v345
    %403 = vmatpush2.bf16.msra.mxu0 %v344
    %404 = vmatprep.subr.bf16.mxu0 %v343
    %405 = vmatpush2.bf16.msra.mxu0 %v342
    %406 = vmatprep.subr.bf16.mxu0 %v341
    %407 = vmatpush2.bf16.msra.mxu0 %v340
    %408 = vmatprep.subr.bf16.mxu0 %v339
    %409 = vmatpush2.bf16.msra.mxu0 %v338
    %410 = vmatprep.subr.bf16.mxu0 %v337
    %411 = vmatpush2.bf16.msra.mxu0 %v336
    %412 = vmatprep.subr.bf16.mxu0 %v335
    %413 = vmatpush2.bf16.msra.mxu0 %v334
    %414 = vmatprep.mubr.bf16.mxu0 %v177
    %415 = vmatmul.mubr.bf16.gmra.mxu0 %v176
    %v416 = vpop.f32.mrf.mxu0
    %v417 = vadd.f32 %v215, %v416
    %v418 = vpop.f32.mrf.mxu0
    %v419 = vadd.f32 %v219, %v418
    %v420 = vpop.f32.mrf.mxu0
    %v421 = vpop.f32.mrf.mxu0
    %422 = vdwg.mxu0
    %vm423 = vcmp.gt.f32.partialorder %v417, 0.0
    %vm424 = vcmp.gt.f32.partialorder %v419, 0.0
    %v425 = vmul.f32 %v417, 0.01
    %v426 = vmul.f32 %v419, 0.01
    %v427 = vsel %vm423, %v417, %v425
    %v428 = vsel %vm424, %v419, %v426
    %v429 = vpack.c.bf16 %v427, %v427
    %v430 = vpack.c.bf16 %v428, %v428
    %v431 = vld [vmem:[#allocation8] sm:$0xff]
    %v432 = vld [vmem:[#allocation8 + $0x8] sm:$0xff]
    %v433 = vld [vmem:[#allocation8 + $0x10] sm:$0xff]
    %v434 = vld [vmem:[#allocation8 + $0x18] sm:$0xff]
    %v435 = vld [vmem:[#allocation8 + $0x20] sm:$0xff]
    %v436 = vld [vmem:[#allocation8 + $0x28] sm:$0xff]
    %v437 = vld [vmem:[#allocation8 + $0x30] sm:$0xff]
    %v438 = vld [vmem:[#allocation8 + $0x38] sm:$0xff]
    %v439 = vld [vmem:[#allocation8 + $0x40] sm:$0xff]
    %v440 = vld [vmem:[#allocation8 + $0x48] sm:$0xff]
    %v441 = vld [vmem:[#allocation8 + $0x50] sm:$0xff]
    %v442 = vld [vmem:[#allocation8 + $0x58] sm:$0xff]
    %v443 = vld [vmem:[#allocation8 + $0x60] sm:$0xff]
    %v444 = vld [vmem:[#allocation8 + $0x68] sm:$0xff]
    %v445 = vld [vmem:[#allocation8 + $0x70] sm:$0xff]
    %v446 = vld [vmem:[#allocation8 + $0x78] sm:$0xff]
    %v447 = vld [vmem:[#allocation8 + $0x80] sm:$0xff]
    %v448 = vld [vmem:[#allocation8 + $0x88] sm:$0xff]
    %v449 = vld [vmem:[#allocation8 + $0x90] sm:$0xff]
    %v450 = vld [vmem:[#allocation8 + $0x98] sm:$0xff]
    %v451 = vld [vmem:[#allocation8 + $0xa0] sm:$0xff]
    %v452 = vld [vmem:[#allocation8 + $0xa8] sm:$0xff]
    %v453 = vld [vmem:[#allocation8 + $0xb0] sm:$0xff]
    %v454 = vld [vmem:[#allocation8 + $0xb8] sm:$0xff]
    %v455 = vld [vmem:[#allocation8 + $0xc0] sm:$0xff]
    %v456 = vld [vmem:[#allocation8 + $0xc8] sm:$0xff]
    %v457 = vld [vmem:[#allocation8 + $0xd0] sm:$0xff]
    %v458 = vld [vmem:[#allocation8 + $0xd8] sm:$0xff]
    %v459 = vld [vmem:[#allocation8 + $0xe0] sm:$0xff]
    %v460 = vld [vmem:[#allocation8 + $0xe8] sm:$0xff]
    %v461 = vld [vmem:[#allocation8 + $0xf0] sm:$0xff]
    %v462 = vld [vmem:[#allocation8 + $0xf8] sm:$0xff]
    %v463 = vld [vmem:[%s6] sm:$0x3]
    %v465 = vlaneseq
    %v466 = vshrl.u32 %v465, 7
    %v467 = vsub.s32 0, %v466
    %v468 = vrot.slane %v463, %v467
    %v469 = vlaneseq
    %v470 = vshrl.u32 %v469, 7
    %v471 = vsub.s32 1, %v470
    %v472 = vrot.slane %v463, %v471
    %v507 = vunpack.c.l.b16 %v431
    %v508 = vunpack.c.h.b16 %v431
    %v509 = vunpack.c.l.b16 %v432
    %v510 = vunpack.c.h.b16 %v432
    %v511 = vunpack.c.l.b16 %v433
    %v512 = vunpack.c.h.b16 %v433
    %v513 = vunpack.c.l.b16 %v434
    %v514 = vunpack.c.h.b16 %v434
    %v515 = vunpack.c.l.b16 %v435
    %v516 = vunpack.c.h.b16 %v435
    %v517 = vunpack.c.l.b16 %v436
    %v518 = vunpack.c.h.b16 %v436
    %v519 = vunpack.c.l.b16 %v437
    %v520 = vunpack.c.h.b16 %v437
    %v521 = vunpack.c.l.b16 %v438
    %v522 = vunpack.c.h.b16 %v438
    %v523 = vunpack.c.l.b16 %v439
    %v524 = vunpack.c.h.b16 %v439
    %v525 = vunpack.c.l.b16 %v440
    %v526 = vunpack.c.h.b16 %v440
    %v527 = vunpack.c.l.b16 %v441
    %v528 = vunpack.c.h.b16 %v441
    %v529 = vunpack.c.l.b16 %v442
    %v530 = vunpack.c.h.b16 %v442
    %v531 = vunpack.c.l.b16 %v443
    %v532 = vunpack.c.h.b16 %v443
    %v533 = vunpack.c.l.b16 %v444
    %v534 = vunpack.c.h.b16 %v444
    %v535 = vunpack.c.l.b16 %v445
    %v536 = vunpack.c.h.b16 %v445
    %v537 = vunpack.c.l.b16 %v446
    %v538 = vunpack.c.h.b16 %v446
    %v539 = vunpack.c.l.b16 %v447
    %v540 = vunpack.c.h.b16 %v447
    %v541 = vunpack.c.l.b16 %v448
    %v542 = vunpack.c.h.b16 %v448
    %v543 = vunpack.c.l.b16 %v449
    %v544 = vunpack.c.h.b16 %v449
    %v545 = vunpack.c.l.b16 %v450
    %v546 = vunpack.c.h.b16 %v450
    %v547 = vunpack.c.l.b16 %v451
    %v548 = vunpack.c.h.b16 %v451
    %v549 = vunpack.c.l.b16 %v452
    %v550 = vunpack.c.h.b16 %v452
    %v551 = vunpack.c.l.b16 %v453
    %v552 = vunpack.c.h.b16 %v453
    %v553 = vunpack.c.l.b16 %v454
    %v554 = vunpack.c.h.b16 %v454
    %v555 = vunpack.c.l.b16 %v455
    %v556 = vunpack.c.h.b16 %v455
    %v557 = vunpack.c.l.b16 %v456
    %v558 = vunpack.c.h.b16 %v456
    %v559 = vunpack.c.l.b16 %v457
    %v560 = vunpack.c.h.b16 %v457
    %v561 = vunpack.c.l.b16 %v458
    %v562 = vunpack.c.h.b16 %v458
    %v563 = vunpack.c.l.b16 %v459
    %v564 = vunpack.c.h.b16 %v459
    %v565 = vunpack.c.l.b16 %v460
    %v566 = vunpack.c.h.b16 %v460
    %v567 = vunpack.c.l.b16 %v461
    %v568 = vunpack.c.h.b16 %v461
    %v569 = vunpack.c.l.b16 %v462
    %v570 = vunpack.c.h.b16 %v462
    %v571 = vpack.c.b16 %v509, %v507
    %v572 = vpack.c.b16 %v510, %v508
    %v573 = vpack.c.b16 %v513, %v511
    %v574 = vpack.c.b16 %v514, %v512
    %v575 = vpack.c.b16 %v517, %v515
    %v576 = vpack.c.b16 %v518, %v516
    %v577 = vpack.c.b16 %v521, %v519
    %v578 = vpack.c.b16 %v522, %v520
    %v579 = vpack.c.b16 %v525, %v523
    %v580 = vpack.c.b16 %v526, %v524
    %v581 = vpack.c.b16 %v529, %v527
    %v582 = vpack.c.b16 %v530, %v528
    %v583 = vpack.c.b16 %v533, %v531
    %v584 = vpack.c.b16 %v534, %v532
    %v585 = vpack.c.b16 %v537, %v535
    %v586 = vpack.c.b16 %v538, %v536
    %v587 = vpack.c.b16 %v541, %v539
    %v588 = vpack.c.b16 %v542, %v540
    %v589 = vpack.c.b16 %v545, %v543
    %v590 = vpack.c.b16 %v546, %v544
    %v591 = vpack.c.b16 %v549, %v547
    %v592 = vpack.c.b16 %v550, %v548
    %v593 = vpack.c.b16 %v553, %v551
    %v594 = vpack.c.b16 %v554, %v552
    %v595 = vpack.c.b16 %v557, %v555
    %v596 = vpack.c.b16 %v558, %v556
    %v597 = vpack.c.b16 %v561, %v559
    %v598 = vpack.c.b16 %v562, %v560
    %v599 = vpack.c.b16 %v565, %v563
    %v600 = vpack.c.b16 %v566, %v564
    %v601 = vpack.c.b16 %v569, %v567
    %v602 = vpack.c.b16 %v570, %v568
    %635 = vmatprep.subr.bf16.mxu0 %v586
    %636 = vmatpush1.bf16.msra.mxu0 %v585
    %637 = vmatprep.subr.bf16.mxu0 %v584
    %638 = vmatpush1.bf16.msra.mxu0 %v583
    %639 = vmatprep.subr.bf16.mxu0 %v582
    %640 = vmatpush1.bf16.msra.mxu0 %v581
    %641 = vmatprep.subr.bf16.mxu0 %v580
    %642 = vmatpush1.bf16.msra.mxu0 %v579
    %643 = vmatprep.subr.bf16.mxu0 %v578
    %644 = vmatpush1.bf16.msra.mxu0 %v577
    %645 = vmatprep.subr.bf16.mxu0 %v576
    %646 = vmatpush1.bf16.msra.mxu0 %v575
    %647 = vmatprep.subr.bf16.mxu0 %v574
    %648 = vmatpush1.bf16.msra.mxu0 %v573
    %649 = vmatprep.subr.bf16.mxu0 %v572
    %650 = vmatpush1.bf16.msra.mxu0 %v571
    %651 = vmatprep.subr.bf16.mxu0 %v602
    %652 = vmatpush2.bf16.msra.mxu0 %v601
    %653 = vmatprep.subr.bf16.mxu0 %v600
    %654 = vmatpush2.bf16.msra.mxu0 %v599
    %655 = vmatprep.subr.bf16.mxu0 %v598
    %656 = vmatpush2.bf16.msra.mxu0 %v597
    %657 = vmatprep.subr.bf16.mxu0 %v596
    %658 = vmatpush2.bf16.msra.mxu0 %v595
    %659 = vmatprep.subr.bf16.mxu0 %v594
    %660 = vmatpush2.bf16.msra.mxu0 %v593
    %661 = vmatprep.subr.bf16.mxu0 %v592
    %662 = vmatpush2.bf16.msra.mxu0 %v591
    %663 = vmatprep.subr.bf16.mxu0 %v590
    %664 = vmatpush2.bf16.msra.mxu0 %v589
    %665 = vmatprep.subr.bf16.mxu0 %v588
    %666 = vmatpush2.bf16.msra.mxu0 %v587
    %667 = vmatprep.mubr.bf16.mxu0 %v430
    %668 = vmatmul.mubr.bf16.gmra.mxu0 %v429
    %v669 = vpop.f32.mrf.mxu0
    %v670 = vadd.f32 %v468, %v669
    %v671 = vpop.f32.mrf.mxu0
    %v672 = vadd.f32 %v472, %v671
    %v673 = vpop.f32.mrf.mxu0
    %v674 = vpop.f32.mrf.mxu0
    %675 = vdwg.mxu0
    %vm676 = vcmp.gt.f32.partialorder %v670, 0.0
    %vm677 = vcmp.gt.f32.partialorder %v672, 0.0
    %v678 = vmul.f32 %v670, 0.01
    %v679 = vmul.f32 %v672, 0.01
    %v680 = vsel %vm676, %v670, %v678
    %v681 = vsel %vm677, %v672, %v679
    %v682 = vpack.c.bf16 %v680, %v680
    %v683 = vpack.c.bf16 %v681, %v681
    %v684 = vld [vmem:[#allocation10] sm:$0xf]
    %v685 = vld [vmem:[#allocation10 + $0x4] sm:$0xf]
    %v686 = vld [vmem:[#allocation10 + $0x8] sm:$0xf]
    %v687 = vld [vmem:[#allocation10 + $0xc] sm:$0xf]
    %v688 = vld [vmem:[#allocation10 + $0x10] sm:$0xf]
    %v689 = vld [vmem:[#allocation10 + $0x14] sm:$0xf]
    %v690 = vld [vmem:[#allocation10 + $0x18] sm:$0xf]
    %v691 = vld [vmem:[#allocation10 + $0x1c] sm:$0xf]
    %v692 = vld [vmem:[#allocation10 + $0x20] sm:$0xf]
    %v693 = vld [vmem:[#allocation10 + $0x24] sm:$0xf]
    %v694 = vld [vmem:[#allocation10 + $0x28] sm:$0xf]
    %v695 = vld [vmem:[#allocation10 + $0x2c] sm:$0xf]
    %v696 = vld [vmem:[#allocation10 + $0x30] sm:$0xf]
    %v697 = vld [vmem:[#allocation10 + $0x34] sm:$0xf]
    %v698 = vld [vmem:[#allocation10 + $0x38] sm:$0xf]
    %v699 = vld [vmem:[#allocation10 + $0x3c] sm:$0xf]
    %v700 = vld [vmem:[#allocation10 + $0x40] sm:$0xf]
    %v701 = vld [vmem:[#allocation10 + $0x44] sm:$0xf]
    %v702 = vld [vmem:[#allocation10 + $0x48] sm:$0xf]
    %v703 = vld [vmem:[#allocation10 + $0x4c] sm:$0xf]
    %v704 = vld [vmem:[#allocation10 + $0x50] sm:$0xf]
    %v705 = vld [vmem:[#allocation10 + $0x54] sm:$0xf]
    %v706 = vld [vmem:[#allocation10 + $0x58] sm:$0xf]
    %v707 = vld [vmem:[#allocation10 + $0x5c] sm:$0xf]
    %v708 = vld [vmem:[#allocation10 + $0x60] sm:$0xf]
    %v709 = vld [vmem:[#allocation10 + $0x64] sm:$0xf]
    %v710 = vld [vmem:[#allocation10 + $0x68] sm:$0xf]
    %v711 = vld [vmem:[#allocation10 + $0x6c] sm:$0xf]
    %v712 = vld [vmem:[#allocation10 + $0x70] sm:$0xf]
    %v713 = vld [vmem:[#allocation10 + $0x74] sm:$0xf]
    %v714 = vld [vmem:[#allocation10 + $0x78] sm:$0xf]
    %v715 = vld [vmem:[#allocation10 + $0x7c] sm:$0xf]
    %v716 = vld [vmem:[%s8] sm:$0x1]
    %v718 = vlaneseq
    %v719 = vshrl.u32 %v718, 7
    %v720 = vsub.s32 0, %v719
    %v721 = vrot.slane %v716, %v720
    %v755 = vunpack.c.l.b16 %v684
    %v756 = vunpack.c.l.b16 %v685
    %v757 = vunpack.c.l.b16 %v686
    %v758 = vunpack.c.l.b16 %v687
    %v759 = vunpack.c.l.b16 %v688
    %v760 = vunpack.c.l.b16 %v689
    %v761 = vunpack.c.l.b16 %v690
    %v762 = vunpack.c.l.b16 %v691
    %v763 = vunpack.c.l.b16 %v692
    %v764 = vunpack.c.l.b16 %v693
    %v765 = vunpack.c.l.b16 %v694
    %v766 = vunpack.c.l.b16 %v695
    %v767 = vunpack.c.l.b16 %v696
    %v768 = vunpack.c.l.b16 %v697
    %v769 = vunpack.c.l.b16 %v698
    %v770 = vunpack.c.l.b16 %v699
    %v771 = vunpack.c.l.b16 %v700
    %v772 = vunpack.c.l.b16 %v701
    %v773 = vunpack.c.l.b16 %v702
    %v774 = vunpack.c.l.b16 %v703
    %v775 = vunpack.c.l.b16 %v704
    %v776 = vunpack.c.l.b16 %v705
    %v777 = vunpack.c.l.b16 %v706
    %v778 = vunpack.c.l.b16 %v707
    %v779 = vunpack.c.l.b16 %v708
    %v780 = vunpack.c.l.b16 %v709
    %v781 = vunpack.c.l.b16 %v710
    %v782 = vunpack.c.l.b16 %v711
    %v783 = vunpack.c.l.b16 %v712
    %v784 = vunpack.c.l.b16 %v713
    %v785 = vunpack.c.l.b16 %v714
    %v786 = vunpack.c.l.b16 %v715
    %v787 = vpack.c.b16 %v756, %v755
    %v788 = vpack.c.b16 %v758, %v757
    %v789 = vpack.c.b16 %v760, %v759
    %v790 = vpack.c.b16 %v762, %v761
    %v791 = vpack.c.b16 %v764, %v763
    %v792 = vpack.c.b16 %v766, %v765
    %v793 = vpack.c.b16 %v768, %v767
    %v794 = vpack.c.b16 %v770, %v769
    %v795 = vpack.c.b16 %v772, %v771
    %v796 = vpack.c.b16 %v774, %v773
    %v797 = vpack.c.b16 %v776, %v775
    %v798 = vpack.c.b16 %v778, %v777
    %v799 = vpack.c.b16 %v780, %v779
    %v800 = vpack.c.b16 %v782, %v781
    %v801 = vpack.c.b16 %v784, %v783
    %v802 = vpack.c.b16 %v786, %v785
    %819 = vmatprep.subr.bf16.mxu0 0
    %820 = vmatpush1.bf16.msra.mxu0 %v794
    %821 = vmatprep.subr.bf16.mxu0 0
    %822 = vmatpush1.bf16.msra.mxu0 %v793
    %823 = vmatprep.subr.bf16.mxu0 0
    %824 = vmatpush1.bf16.msra.mxu0 %v792
    %825 = vmatprep.subr.bf16.mxu0 0
    %826 = vmatpush1.bf16.msra.mxu0 %v791
    %827 = vmatprep.subr.bf16.mxu0 0
    %828 = vmatpush1.bf16.msra.mxu0 %v790
    %829 = vmatprep.subr.bf16.mxu0 0
    %830 = vmatpush1.bf16.msra.mxu0 %v789
    %831 = vmatprep.subr.bf16.mxu0 0
    %832 = vmatpush1.bf16.msra.mxu0 %v788
    %833 = vmatprep.subr.bf16.mxu0 0
    %834 = vmatpush1.bf16.msra.mxu0 %v787
    %835 = vmatprep.subr.bf16.mxu0 0
    %836 = vmatpush2.bf16.msra.mxu0 %v802
    %837 = vmatprep.subr.bf16.mxu0 0
    %838 = vmatpush2.bf16.msra.mxu0 %v801
    %839 = vmatprep.subr.bf16.mxu0 0
    %840 = vmatpush2.bf16.msra.mxu0 %v800
    %841 = vmatprep.subr.bf16.mxu0 0
    %842 = vmatpush2.bf16.msra.mxu0 %v799
    %843 = vmatprep.subr.bf16.mxu0 0
    %844 = vmatpush2.bf16.msra.mxu0 %v798
    %845 = vmatprep.subr.bf16.mxu0 0
    %846 = vmatpush2.bf16.msra.mxu0 %v797
    %847 = vmatprep.subr.bf16.mxu0 0
    %848 = vmatpush2.bf16.msra.mxu0 %v796
    %849 = vmatprep.subr.bf16.mxu0 0
    %850 = vmatpush2.bf16.msra.mxu0 %v795
    %851 = vmatprep.mubr.bf16.mxu0 %v683
    %852 = vmatmul.mubr.bf16.gmra.mxu0 %v682
    %v853 = vpop.f32.mrf.mxu0
    %v854 = vadd.f32 %v721, %v853
    %v855 = vpop.f32.mrf.mxu0
    %v856 = vpop.f32.mrf.mxu0
    %v857 = vpop.f32.mrf.mxu0
    %858 = vdwg.mxu0
    %859 = vmax.xlane.f32.xlu0 %v854
    %v860 = vpop.xlane.xlu0 %859
    %v861 = vsub.f32 %v854, %v860
    %v862 = vmul.f32 %v861, 1.442695
    %v863 = vpow.pop %v862
    %864 = vadd.xlane.f32.xlu0 %v863
    %v865 = vpop.xlane.xlu0 %864
    %v866 = vrcp.pop %v865
    %v867 = vmul.f32 %v863, %v866
    %v868 = vpack.c.bf16 %v867, %v867
    %869 = vst [vmem:[#allocation11] sm:$0xf] %v868
    // Predicated region
    $region58: #{tpu_custom_call.1} parent=1 // pred_check
      _
    $region59: #{tpu_custom_call.1} parent=1 // pred_check_branch
      %871 = sbr.rel (0) target = $region61
    $region60: #{tpu_custom_call.1} parent=1 // pred_region
      %s873 = ssub.s32 64, 64
      %874 = vsyncadd [#allocation4], %s873
      %s876 = sshll.u32 [#allocation11], 4
      %s877 = int_to_ptr.vmem [resolvable:$true] %s876
      %879 = dma.vmem_to_hbm [thread:$0]  %s877, 64, %s9, [#allocation4]
    $region61: #{tpu_custom_call.1} parent=1 // pred_fallthru
      _
    // Predicated region
    $region62: #{tpu_custom_call.1} parent=1 // pred_check
      _
    $region63: #{tpu_custom_call.1} parent=1 // pred_check_branch
      %881 = sbr.rel (0) target = $region65
    $region64: #{tpu_custom_call.1} parent=1 // pred_region
      %882 = dma.done [#allocation4], 64
    $region65: #{tpu_custom_call.1} parent=1 // pred_fallthru
      _
    %883 = vsyncpa [#allocation3], 1
    %884 = vsyncpa [#allocation6], 1
    %885 = vsyncpa [#allocation9], 1
    %886 = vsyncpa [#allocation4], 1

</llo_original>
